<compile_context>
chip_gen: v7x
topology: tpu7x:2x2x1
jax: 0.10.0
libtpu: 0.0.40
codegen_flags: <defaults>
</compile_context>

<pallas_src>
import functools
import math

import jax
import jax.numpy as jnp
from jax.experimental import pallas as pl
from jax.experimental.pallas import tpu as pltpu

LANE = 128  # TPU lane width; classifier output padded to this for lane-dense stores


# ----------------------------- in-kernel helpers -----------------------------

def _layernorm(x, gamma, beta, eps=1e-5):
    # matches torch.nn.LayerNorm (biased variance, eps=1e-5); computed in f32
    mu = jnp.mean(x, axis=-1, keepdims=True)
    var = jnp.mean(jnp.square(x - mu), axis=-1, keepdims=True)
    return (x - mu) * jax.lax.rsqrt(var + eps) * gamma + beta


def _gelu_tanh(x):
    # TODO(synk): nn.GELU() default is the exact erf form; tanh approximation
    # (max abs err ~1e-3) is used because erf lowering inside Pallas TPU kernels
    # is not guaranteed.
    c = math.sqrt(2.0 / math.pi)
    return 0.5 * x * (1.0 + jnp.tanh(c * (x + 0.044715 * x * x * x)))


# ------------------------ fused encoder (+ head) kernel ------------------------

def encoder_kernel(x0_ref, wqkv_ref, bqkv_ref, wo_ref, bo_ref,
                   ln1g_ref, ln1b_ref, w1_ref, b1_ref, w2_ref, b2_ref,
                   ln2g_ref, ln2b_ref,
                   lng_ref, lnb_ref, fcw_ref, fcb_ref,
                   out_ref, x_scr, *, Bc, T, n_heads, d_k):
    l = pl.program_id(1)                       # layer index (inner, "arbitrary")
    BTc = Bc * T
    hd = n_heads * d_k
    cdt = x_scr.dtype                          # bf16 compute dtype for MXU inputs

    # Layer 0 of this chunk: pull the embedded/pos-encoded tokens into the
    # resident VMEM slab.
    @pl.when(l == 0)
    def _():
        x_scr[...] = x0_ref[0]

    x = x_scr[...]                             # (BTc, D) bf16, resident across layers
    D = x.shape[-1]

    # ---- fused QKV projection: one (BTc,D)@(D,3*hd) MXU op, f32 accum ----
    qkv = jnp.dot(x, wqkv_ref[0], preferred_element_type=jnp.float32) + bqkv_ref[0]

    def split_heads(a):                        # (BTc, hd) -> (H*Bc, T, d_k)
        # lane-slice per head, reshape only the (sublane) row dim, stack heads
        # along the leading (batch) axis -> no (BT,BT) scores, no per-head dots.
        return jnp.concatenate(
            [a[:, h * d_k:(h + 1) * d_k].reshape(Bc, T, d_k) for h in range(n_heads)],
            axis=0)

    q = split_heads(qkv[:, 0:hd]).astype(cdt)
    k = split_heads(qkv[:, hd:2 * hd]).astype(cdt)
    v = split_heads(qkv[:, 2 * hd:3 * hd]).astype(cdt)

    # ---- per-(sequence, head) attention, batched over the leading dim ----
    # TODO(synk): user-supplied attention mask not implemented (Encoder runs mask=None).
    s = jnp.einsum('bqd,bkd->bqk', q, k,
                   preferred_element_type=jnp.float32) * (1.0 / math.sqrt(d_k))
    s = s - jnp.max(s, axis=-1, keepdims=True)            # stable softmax (f32)
    e = jnp.exp(s)
    p = e * pl.reciprocal(jnp.sum(e, axis=-1, keepdims=True), approx=True)
    o = jnp.einsum('bqk,bkd->bqd', p.astype(cdt), v,
                   preferred_element_type=jnp.float32)     # (H*Bc, T, d_k)

    # merge heads into one contiguous (BTc, hd) tile, then ONE output projection
    o = jnp.concatenate(
        [o[h * Bc:(h + 1) * Bc].reshape(BTc, d_k) for h in range(n_heads)], axis=-1)
    attn = jnp.dot(o.astype(cdt), wo_ref[0],
                   preferred_element_type=jnp.float32) + bo_ref[0]

    # residual + post-LN (f32)
    x1 = _layernorm(x.astype(jnp.float32) + attn, ln1g_ref[0], ln1b_ref[0])

    # ---- feed-forward: Linear(D,4D) -> GELU -> Linear(4D,D) ----
    h1 = jnp.dot(x1.astype(cdt), w1_ref[0], preferred_element_type=jnp.float32) + b1_ref[0]
    h1 = _gelu_tanh(h1)
    ffo = jnp.dot(h1.astype(cdt), w2_ref[0], preferred_element_type=jnp.float32) + b2_ref[0]
    x2 = _layernorm(x1 + ffo, ln2g_ref[0], ln2b_ref[0])

    x_scr[...] = x2.astype(cdt)                # carried to next layer in VMEM

    # ---- classifier head fused into the final layer step of this chunk ----
    @pl.when(l == pl.num_programs(1) - 1)
    def _():
        cls = x2.reshape(Bc, T, D)[:, 0, :]    # CLS rows: one slice of a (Bc,T,D) view
        cls = _layernorm(cls, lng_ref[...], lnb_ref[...])
        out_ref[0] = (jnp.dot(cls, fcw_ref[...], preferred_element_type=jnp.float32)
                      + fcb_ref[...])          # lane-dense (Bc, 128) store


# ------------------------------ parameter setup -------------------------------

def init_params(key, vocab_size, max_len, d_k, d_model, n_heads, n_layers, n_classes):
    assert d_model % 2 == 0
    hd = n_heads * d_k
    ff = 4 * d_model
    npad = ((n_classes + LANE - 1) // LANE) * LANE

    k_emb, k_fc, k_blocks = jax.random.split(key, 3)

    params = {}
    params["embedding"] = jax.random.normal(k_emb, (vocab_size, d_model), jnp.float32) * 0.02

    # sinusoidal positional encoding table (same construction as PositionalEncoding)
    pos = jnp.arange(max_len, dtype=jnp.float32)[:, None]
    div = jnp.exp(jnp.arange(0, d_model, 2, dtype=jnp.float32) * (-math.log(10000.0) / d_model))
    pe = jnp.zeros((max_len, d_model), jnp.float32)
    pe = pe.at[:, 0::2].set(jnp.sin(pos * div))
    pe = pe.at[:, 1::2].set(jnp.cos(pos * div))
    params["pos_encoding"] = pe

    def lin(k, fan_in, fan_out):
        return jax.random.normal(k, (fan_in, fan_out), jnp.float32) * (1.0 / math.sqrt(fan_in))

    lkeys = jax.random.split(k_blocks, n_layers)
    Wqkv, Wo, W1, W2 = [], [], [], []
    for layer in range(n_layers):
        ks = jax.random.split(lkeys[layer], 6)
        wq, wk, wv = lin(ks[0], d_model, hd), lin(ks[1], d_model, hd), lin(ks[2], d_model, hd)
        Wqkv.append(jnp.concatenate([wq, wk, wv], axis=1))          # fused (D, 3*hd)
        Wo.append(lin(ks[3], hd, d_model))
        W1.append(lin(ks[4], d_model, ff))
        W2.append(lin(ks[5], ff, d_model))

    L = n_layers
    bf16 = jnp.bfloat16
    # big matrices in bf16 (halves weight DMA + VMEM); biases / LN params in f32
    params["Wqkv"] = jnp.stack(Wqkv).astype(bf16)                    # (L, D, 3*hd)
    params["bqkv"] = jnp.zeros((L, 1, 3 * hd), jnp.float32)
    params["Wo"] = jnp.stack(Wo).astype(bf16)                        # (L, hd, D)
    params["bo"] = jnp.zeros((L, 1, d_model), jnp.float32)
    params["ln1_g"] = jnp.ones((L, 1, d_model), jnp.float32)
    params["ln1_b"] = jnp.zeros((L, 1, d_model), jnp.float32)
    params["W1"] = jnp.stack(W1).astype(bf16)                        # (L, D, 4D)
    params["b1"] = jnp.zeros((L, 1, ff), jnp.float32)
    params["W2"] = jnp.stack(W2).astype(bf16)                        # (L, 4D, D)
    params["b2"] = jnp.zeros((L, 1, d_model), jnp.float32)
    params["ln2_g"] = jnp.ones((L, 1, d_model), jnp.float32)
    params["ln2_b"] = jnp.zeros((L, 1, d_model), jnp.float32)

    params["ln_g"] = jnp.ones((1, d_model), jnp.float32)
    params["ln_b"] = jnp.zeros((1, d_model), jnp.float32)
    fc_w = lin(k_fc, d_model, n_classes)
    fc_b = jnp.zeros((1, n_classes), jnp.float32)
    # lane-pad the classifier weights so the final store is lane-dense (last dim 128)
    params["fc_w_pad"] = jnp.zeros((d_model, npad), jnp.float32).at[:, :n_classes].set(fc_w)
    params["fc_b_pad"] = jnp.zeros((1, npad), jnp.float32).at[:, :n_classes].set(fc_b)
    return params


# ------------------------------- full forward ---------------------------------

def encoder_forward(tokens, params, *, n_heads, d_k, n_classes, batch_chunks=1):
    B, T = tokens.shape
    D = params["embedding"].shape[1]
    hd = n_heads * d_k
    ff = params["W1"].shape[-1]
    L = params["Wqkv"].shape[0]
    npad = params["fc_w_pad"].shape[1]

    C = batch_chunks
    assert B % C == 0, "batch_chunks must divide the batch size"
    Bc = B // C
    BTc = Bc * T

    # Embedding gather + positional-encoding add: plain-JAX glue, then lay out
    # as (C, Bc*T, D) bf16 chunk slabs for the fused kernel.
    x0 = jnp.take(params["embedding"], tokens, axis=0) + params["pos_encoding"][None, :T, :]
    x0 = x0.reshape(C, BTc, D).astype(jnp.bfloat16)

    def const(shape):
        return pl.BlockSpec(shape, lambda c, l, _n=len(shape): (0,) * _n)

    def per_layer(shape):
        return pl.BlockSpec((1,) + shape, lambda c, l, _n=len(shape): (l,) + (0,) * _n)

    in_specs = [
        pl.BlockSpec((1, BTc, D), lambda c, l: (c, 0, 0)),  # x0 chunk (read at l==0)
        per_layer((D, 3 * hd)), per_layer((1, 3 * hd)),     # Wqkv, bqkv
        per_layer((hd, D)), per_layer((1, D)),              # Wo, bo
        per_layer((1, D)), per_layer((1, D)),               # ln1 gamma/beta
        per_layer((D, ff)), per_layer((1, ff)),             # W1, b1
        per_layer((ff, D)), per_layer((1, D)),              # W2, b2
        per_layer((1, D)), per_layer((1, D)),               # ln2 gamma/beta
        const((1, D)), const((1, D)),                       # final LN gamma/beta
        const((D, npad)), const((1, npad)),                 # classifier W (padded), b
    ]
    out_spec = pl.BlockSpec((1, Bc, npad), lambda c, l: (c, 0, 0))  # written at last layer

    # Explicit VMEM budget (review): double-buffered per-layer weights + consts
    # + x0/out blocks + resident slab, with headroom; capped at 64 MiB (v7x).
    per_layer_w = 2 * (D * 3 * hd + hd * D + D * ff + ff * D)        # bf16 matrices
    per_layer_v = 4 * (3 * hd + 6 * D + ff)                          # f32 biases / LN
    const_b = 4 * (2 * D + D * npad + npad)
    blk_b = 2 * BTc * D + 4 * Bc * npad
    vmem_limit = int(min(64 << 20,
                         2 * (per_layer_w + per_layer_v + const_b + blk_b)
                         + 2 * BTc * D + (4 << 20)))

    kernel = functools.partial(encoder_kernel, Bc=Bc, T=T, n_heads=n_heads, d_k=d_k)
    out = pl.pallas_call(
        kernel,
        out_shape=jax.ShapeDtypeStruct((C, Bc, npad), jnp.float32),
        grid=(C, L),                                        # chunks (parallel) x layers
        in_specs=in_specs,
        out_specs=out_spec,
        scratch_shapes=[pltpu.VMEM((BTc, D), jnp.bfloat16)],  # resident activation slab
        compiler_params=pltpu.CompilerParams(
            dimension_semantics=("parallel", "arbitrary"),
            vmem_limit_bytes=vmem_limit),
    )(x0, params["Wqkv"], params["bqkv"], params["Wo"], params["bo"],
      params["ln1_g"], params["ln1_b"], params["W1"], params["b1"],
      params["W2"], params["b2"], params["ln2_g"], params["ln2_b"],
      params["ln_g"], params["ln_b"], params["fc_w_pad"], params["fc_b_pad"])
    return out.reshape(B, npad)[:, :n_classes]


# ----------------------------------- main --------------------------------------

if __name__ == "__main__":
    vocab_size, max_len = 50, 16
    d_k, d_model, n_heads, n_layers, n_classes = 8, 32, 4, 2, 5
    dropout_prob = 0.1  # identity at inference (not applied)
    B, T = 2, 8

    key = jax.random.PRNGKey(0)
    pkey, tkey = jax.random.split(key)
    params = init_params(pkey, vocab_size, max_len, d_k, d_model, n_heads, n_layers, n_classes)
    tokens = jax.random.randint(tkey, (B, T), 0, vocab_size, dtype=jnp.int32)

    fwd = jax.jit(functools.partial(encoder_forward, n_heads=n_heads, d_k=d_k,
                                    n_classes=n_classes, batch_chunks=2))
    out = fwd(tokens, params)
    out = jax.block_until_ready(out)
    assert out.shape == (B, n_classes) and out.dtype == jnp.float32
    print("KERNEL_OK")
</pallas_src>

<mosaic_0001>
module attributes {stable_mosaic.version = 11 : i64} {
  func.func @encoder_kernel(%arg0: i32, %arg1: i32, %arg2: memref<1x8x32xbf16, #tpu.memory_space<vmem>>, %arg3: memref<1x32x96xbf16, #tpu.memory_space<vmem>>, %arg4: memref<1x1x96xf32, #tpu.memory_space<vmem>>, %arg5: memref<1x32x32xbf16, #tpu.memory_space<vmem>>, %arg6: memref<1x1x32xf32, #tpu.memory_space<vmem>>, %arg7: memref<1x1x32xf32, #tpu.memory_space<vmem>>, %arg8: memref<1x1x32xf32, #tpu.memory_space<vmem>>, %arg9: memref<1x32x128xbf16, #tpu.memory_space<vmem>>, %arg10: memref<1x1x128xf32, #tpu.memory_space<vmem>>, %arg11: memref<1x128x32xbf16, #tpu.memory_space<vmem>>, %arg12: memref<1x1x32xf32, #tpu.memory_space<vmem>>, %arg13: memref<1x1x32xf32, #tpu.memory_space<vmem>>, %arg14: memref<1x1x32xf32, #tpu.memory_space<vmem>>, %arg15: memref<1x32xf32, #tpu.memory_space<vmem>>, %arg16: memref<1x32xf32, #tpu.memory_space<vmem>>, %arg17: memref<32x128xf32, #tpu.memory_space<vmem>>, %arg18: memref<1x128xf32, #tpu.memory_space<vmem>>, %arg19: memref<1x1x128xf32, #tpu.memory_space<vmem>>, %arg20: memref<8x32xbf16, #tpu.memory_space<vmem>>) attributes {dimension_semantics = [#tpu.dimension_semantics<parallel>, #tpu.dimension_semantics<arbitrary>], iteration_bounds = array<i64: 2, 2>, scalar_prefetch = 0 : i64, scratch_operands = 1 : i64, tpu.core_type = #tpu.core_type<tc>, window_params = [{transform_indices = @transform_0, window_bounds = array<i64: 1, 8, 32>}, {transform_indices = @transform_1, window_bounds = array<i64: 1, 32, 96>}, {transform_indices = @transform_2, window_bounds = array<i64: 1, 1, 96>}, {transform_indices = @transform_3, window_bounds = array<i64: 1, 32, 32>}, {transform_indices = @transform_4, window_bounds = array<i64: 1, 1, 32>}, {transform_indices = @transform_5, window_bounds = array<i64: 1, 1, 32>}, {transform_indices = @transform_6, window_bounds = array<i64: 1, 1, 32>}, {transform_indices = @transform_7, window_bounds = array<i64: 1, 32, 128>}, {transform_indices = @transform_8, window_bounds = array<i64: 1, 1, 128>}, {transform_indices = @transform_9, window_bounds = array<i64: 1, 128, 32>}, {transform_indices = @transform_10, window_bounds = array<i64: 1, 1, 32>}, {transform_indices = @transform_11, window_bounds = array<i64: 1, 1, 32>}, {transform_indices = @transform_12, window_bounds = array<i64: 1, 1, 32>}, {pipeline_mode = #tpu.pipeline_mode<synchronous>, transform_indices = @transform_13, window_bounds = array<i64: 1, 32>}, {pipeline_mode = #tpu.pipeline_mode<synchronous>, transform_indices = @transform_14, window_bounds = array<i64: 1, 32>}, {pipeline_mode = #tpu.pipeline_mode<synchronous>, transform_indices = @transform_15, window_bounds = array<i64: 32, 128>}, {pipeline_mode = #tpu.pipeline_mode<synchronous>, transform_indices = @transform_16, window_bounds = array<i64: 1, 128>}, {transform_indices = @transform_17, window_bounds = array<i64: 1, 1, 128>}]} {
    %c0_i32 = arith.constant 0 : i32
    %0 = arith.cmpi eq, %arg1, %c0_i32 : i32
    %1 = arith.extui %0 : i1 to i32
    %c0_i32_0 = arith.constant 0 : i32
    %2 = arith.cmpi ne, %1, %c0_i32_0 : i32
    scf.if %2 {
      %c0_63 = arith.constant 0 : index
      %c0_64 = arith.constant 0 : index
      %c0_65 = arith.constant 0 : index
      %165 = vector.load %arg2[%c0_63, %c0_64, %c0_65] : memref<1x8x32xbf16, #tpu.memory_space<vmem>>, vector<1x8x32xbf16>
      %166 = vector.shape_cast %165 : vector<1x8x32xbf16> to vector<8x32xbf16>
      %c0_66 = arith.constant 0 : index
      %c0_67 = arith.constant 0 : index
      %167 = vector.load %arg20[%c0_66, %c0_67] : memref<8x32xbf16, #tpu.memory_space<vmem>>, vector<8x32xbf16>
      tpu.vector_store %arg20[%c0_66, %c0_67], %166 {strides = array<i32>} : memref<8x32xbf16, #tpu.memory_space<vmem>>, vector<8x32xbf16>,
    } else {
    }
    %c0 = arith.constant 0 : index
    %c0_1 = arith.constant 0 : index
    %3 = vector.load %arg20[%c0, %c0_1] : memref<8x32xbf16, #tpu.memory_space<vmem>>, vector<8x32xbf16>
    %c0_2 = arith.constant 0 : index
    %c0_3 = arith.constant 0 : index
    %c0_4 = arith.constant 0 : index
    %4 = vector.load %arg3[%c0_2, %c0_3, %c0_4] : memref<1x32x96xbf16, #tpu.memory_space<vmem>>, vector<1x32x96xbf16>
    %5 = vector.shape_cast %4 : vector<1x32x96xbf16> to vector<32x96xbf16>
    %cst = arith.constant dense<0.000000e+00> : vector<8x96xf32>
    %6 = tpu.matmul %3, %5, %cst {dimension_numbers = #tpu.dot_dimension_numbers<[1], [0], [0], [1], [0, 0, 1, 1], [], []>} : vector<8x32xbf16>, vector<32x96xbf16>, vector<8x96xf32> -> vector<8x96xf32>
    %c0_5 = arith.constant 0 : index
    %c0_6 = arith.constant 0 : index
    %c0_7 = arith.constant 0 : index
    %7 = vector.load %arg4[%c0_5, %c0_6, %c0_7] : memref<1x1x96xf32, #tpu.memory_space<vmem>>, vector<1x1x96xf32>
    %8 = vector.shape_cast %7 : vector<1x1x96xf32> to vector<1x96xf32>
    %9 = vector.broadcast %8 : vector<1x96xf32> to vector<8x96xf32>
    %10 = arith.addf %6, %9 : vector<8x96xf32>
    %11 = vector.extract_strided_slice %10 {offsets = [0, 0], sizes = [8, 32], strides = [1, 1]} : vector<8x96xf32> to vector<8x32xf32>
    %12 = vector.extract_strided_slice %11 {offsets = [0, 0], sizes = [8, 8], strides = [1, 1]} : vector<8x32xf32> to vector<8x8xf32>
    %13 = vector.shape_cast %12 : vector<8x8xf32> to vector<1x8x8xf32>
    %14 = vector.extract_strided_slice %11 {offsets = [0, 8], sizes = [8, 8], strides = [1, 1]} : vector<8x32xf32> to vector<8x8xf32>
    %15 = vector.shape_cast %14 : vector<8x8xf32> to vector<1x8x8xf32>
    %16 = vector.extract_strided_slice %11 {offsets = [0, 16], sizes = [8, 8], strides = [1, 1]} : vector<8x32xf32> to vector<8x8xf32>
    %17 = vector.shape_cast %16 : vector<8x8xf32> to vector<1x8x8xf32>
    %18 = vector.extract_strided_slice %11 {offsets = [0, 24], sizes = [8, 8], strides = [1, 1]} : vector<8x32xf32> to vector<8x8xf32>
    %19 = vector.shape_cast %18 : vector<8x8xf32> to vector<1x8x8xf32>
    %20 = tpu.concatenate %13, %15, %17, %19 in 0 : vector<1x8x8xf32>, vector<1x8x8xf32>, vector<1x8x8xf32>, vector<1x8x8xf32> -> vector<4x8x8xf32>
    %21 = arith.truncf %20 : vector<4x8x8xf32> to vector<4x8x8xbf16>
    %22 = vector.extract_strided_slice %10 {offsets = [0, 32], sizes = [8, 32], strides = [1, 1]} : vector<8x96xf32> to vector<8x32xf32>
    %23 = vector.extract_strided_slice %22 {offsets = [0, 0], sizes = [8, 8], strides = [1, 1]} : vector<8x32xf32> to vector<8x8xf32>
    %24 = vector.shape_cast %23 : vector<8x8xf32> to vector<1x8x8xf32>
    %25 = vector.extract_strided_slice %22 {offsets = [0, 8], sizes = [8, 8], strides = [1, 1]} : vector<8x32xf32> to vector<8x8xf32>
    %26 = vector.shape_cast %25 : vector<8x8xf32> to vector<1x8x8xf32>
    %27 = vector.extract_strided_slice %22 {offsets = [0, 16], sizes = [8, 8], strides = [1, 1]} : vector<8x32xf32> to vector<8x8xf32>
    %28 = vector.shape_cast %27 : vector<8x8xf32> to vector<1x8x8xf32>
    %29 = vector.extract_strided_slice %22 {offsets = [0, 24], sizes = [8, 8], strides = [1, 1]} : vector<8x32xf32> to vector<8x8xf32>
    %30 = vector.shape_cast %29 : vector<8x8xf32> to vector<1x8x8xf32>
    %31 = tpu.concatenate %24, %26, %28, %30 in 0 : vector<1x8x8xf32>, vector<1x8x8xf32>, vector<1x8x8xf32>, vector<1x8x8xf32> -> vector<4x8x8xf32>
    %32 = arith.truncf %31 : vector<4x8x8xf32> to vector<4x8x8xbf16>
    %33 = vector.extract_strided_slice %10 {offsets = [0, 64], sizes = [8, 32], strides = [1, 1]} : vector<8x96xf32> to vector<8x32xf32>
    %34 = vector.extract_strided_slice %33 {offsets = [0, 0], sizes = [8, 8], strides = [1, 1]} : vector<8x32xf32> to vector<8x8xf32>
    %35 = vector.shape_cast %34 : vector<8x8xf32> to vector<1x8x8xf32>
    %36 = vector.extract_strided_slice %33 {offsets = [0, 8], sizes = [8, 8], strides = [1, 1]} : vector<8x32xf32> to vector<8x8xf32>
    %37 = vector.shape_cast %36 : vector<8x8xf32> to vector<1x8x8xf32>
    %38 = vector.extract_strided_slice %33 {offsets = [0, 16], sizes = [8, 8], strides = [1, 1]} : vector<8x32xf32> to vector<8x8xf32>
    %39 = vector.shape_cast %38 : vector<8x8xf32> to vector<1x8x8xf32>
    %40 = vector.extract_strided_slice %33 {offsets = [0, 24], sizes = [8, 8], strides = [1, 1]} : vector<8x32xf32> to vector<8x8xf32>
    %41 = vector.shape_cast %40 : vector<8x8xf32> to vector<1x8x8xf32>
    %42 = tpu.concatenate %35, %37, %39, %41 in 0 : vector<1x8x8xf32>, vector<1x8x8xf32>, vector<1x8x8xf32>, vector<1x8x8xf32> -> vector<4x8x8xf32>
    %43 = arith.truncf %42 : vector<4x8x8xf32> to vector<4x8x8xbf16>
    "tpu.trace_start"() <{level = 10 : i32, message = "bqd,bkd->bqk"}> : () -> ()
    %cst_8 = arith.constant dense<0.000000e+00> : vector<4x8x8xf32>
    %44 = tpu.matmul %21, %32, %cst_8 {dimension_numbers = #tpu.dot_dimension_numbers<[2], [2], [1], [1], [0, 0, 0, 1, 1, 1], [0], [0]>} : vector<4x8x8xbf16>, vector<4x8x8xbf16>, vector<4x8x8xf32> -> vector<4x8x8xf32>
    "tpu.trace_stop"() : () -> ()
    %cst_9 = arith.constant 0.353553385 : f32
    %45 = vector.broadcast %cst_9 : f32 to vector<4x8x8xf32>
    %46 = arith.mulf %44, %45 : vector<4x8x8xf32>
    %cst_10 = arith.constant dense<0xFF800000> : vector<4x8xf32>
    %47 = vector.multi_reduction <maximumf>, %46, %cst_10 [2] : vector<4x8x8xf32> to vector<4x8xf32>
    %48 = vector.shape_cast %47 : vector<4x8xf32> to vector<4x8x1xf32>
    %49 = vector.broadcast %48 : vector<4x8x1xf32> to vector<4x8x8xf32>
    %50 = arith.subf %46, %49 : vector<4x8x8xf32>
    %51 = math.exp %50 : vector<4x8x8xf32>
    %cst_11 = arith.constant dense<0.000000e+00> : vector<4x8xf32>
    %52 = vector.multi_reduction <add>, %51, %cst_11 [2] : vector<4x8x8xf32> to vector<4x8xf32>
    %53 = vector.shape_cast %52 : vector<4x8xf32> to vector<4x8x1xf32>
    %54 = tpu.reciprocal %53 {approx = true} : vector<4x8x1xf32> -> vector<4x8x1xf32>
    %55 = vector.broadcast %54 : vector<4x8x1xf32> to vector<4x8x8xf32>
    %56 = arith.mulf %51, %55 : vector<4x8x8xf32>
    %57 = arith.truncf %56 : vector<4x8x8xf32> to vector<4x8x8xbf16>
    "tpu.trace_start"() <{level = 10 : i32, message = "bqk,bkd->bqd"}> : () -> ()
    %cst_12 = arith.constant dense<0.000000e+00> : vector<4x8x8xf32>
    %58 = tpu.matmul %57, %43, %cst_12 {dimension_numbers = #tpu.dot_dimension_numbers<[2], [1], [1], [2], [0, 0, 0, 1, 1, 2], [0], [0]>} : vector<4x8x8xbf16>, vector<4x8x8xbf16>, vector<4x8x8xf32> -> vector<4x8x8xf32>
    "tpu.trace_stop"() : () -> ()
    %59 = vector.extract_strided_slice %58 {offsets = [0, 0, 0], sizes = [1, 8, 8], strides = [1, 1, 1]} : vector<4x8x8xf32> to vector<1x8x8xf32>
    %60 = vector.shape_cast %59 : vector<1x8x8xf32> to vector<8x8xf32>
    %61 = vector.extract_strided_slice %58 {offsets = [1, 0, 0], sizes = [1, 8, 8], strides = [1, 1, 1]} : vector<4x8x8xf32> to vector<1x8x8xf32>
    %62 = vector.shape_cast %61 : vector<1x8x8xf32> to vector<8x8xf32>
    %63 = vector.extract_strided_slice %58 {offsets = [2, 0, 0], sizes = [1, 8, 8], strides = [1, 1, 1]} : vector<4x8x8xf32> to vector<1x8x8xf32>
    %64 = vector.shape_cast %63 : vector<1x8x8xf32> to vector<8x8xf32>
    %65 = vector.extract_strided_slice %58 {offsets = [3, 0, 0], sizes = [1, 8, 8], strides = [1, 1, 1]} : vector<4x8x8xf32> to vector<1x8x8xf32>
    %66 = vector.shape_cast %65 : vector<1x8x8xf32> to vector<8x8xf32>
    %67 = tpu.concatenate %60, %62, %64, %66 in 1 : vector<8x8xf32>, vector<8x8xf32>, vector<8x8xf32>, vector<8x8xf32> -> vector<8x32xf32>
    %68 = arith.truncf %67 : vector<8x32xf32> to vector<8x32xbf16>
    %c0_13 = arith.constant 0 : index
    %c0_14 = arith.constant 0 : index
    %c0_15 = arith.constant 0 : index
    %69 = vector.load %arg5[%c0_13, %c0_14, %c0_15] : memref<1x32x32xbf16, #tpu.memory_space<vmem>>, vector<1x32x32xbf16>
    %70 = vector.shape_cast %69 : vector<1x32x32xbf16> to vector<32x32xbf16>
    %cst_16 = arith.constant dense<0.000000e+00> : vector<8x32xf32>
    %71 = tpu.matmul %68, %70, %cst_16 {dimension_numbers = #tpu.dot_dimension_numbers<[1], [0], [0], [1], [0, 0, 1, 1], [], []>} : vector<8x32xbf16>, vector<32x32xbf16>, vector<8x32xf32> -> vector<8x32xf32>
    %c0_17 = arith.constant 0 : index
    %c0_18 = arith.constant 0 : index
    %c0_19 = arith.constant 0 : index
    %72 = vector.load %arg6[%c0_17, %c0_18, %c0_19] : memref<1x1x32xf32, #tpu.memory_space<vmem>>, vector<1x1x32xf32>
    %73 = vector.shape_cast %72 : vector<1x1x32xf32> to vector<1x32xf32>
    %74 = vector.broadcast %73 : vector<1x32xf32> to vector<8x32xf32>
    %75 = arith.addf %71, %74 : vector<8x32xf32>
    %76 = arith.extf %3 : vector<8x32xbf16> to vector<8x32xf32>
    %77 = arith.addf %76, %75 : vector<8x32xf32>
    %c0_20 = arith.constant 0 : index
    %c0_21 = arith.constant 0 : index
    %c0_22 = arith.constant 0 : index
    %78 = vector.load %arg7[%c0_20, %c0_21, %c0_22] : memref<1x1x32xf32, #tpu.memory_space<vmem>>, vector<1x1x32xf32>
    %79 = vector.shape_cast %78 : vector<1x1x32xf32> to vector<1x32xf32>
    %c0_23 = arith.constant 0 : index
    %c0_24 = arith.constant 0 : index
    %c0_25 = arith.constant 0 : index
    %80 = vector.load %arg8[%c0_23, %c0_24, %c0_25] : memref<1x1x32xf32, #tpu.memory_space<vmem>>, vector<1x1x32xf32>
    %81 = vector.shape_cast %80 : vector<1x1x32xf32> to vector<1x32xf32>
    %cst_26 = arith.constant dense<0.000000e+00> : vector<8xf32>
    %82 = vector.multi_reduction <add>, %77, %cst_26 [1] : vector<8x32xf32> to vector<8xf32>
    %83 = vector.shape_cast %82 : vector<8xf32> to vector<8x1xf32>
    %cst_27 = arith.constant 3.200000e+01 : f32
    %84 = vector.broadcast %cst_27 : f32 to vector<8x1xf32>
    %85 = arith.divf %83, %84 : vector<8x1xf32>
    %86 = vector.broadcast %85 : vector<8x1xf32> to vector<8x32xf32>
    %87 = arith.subf %77, %86 : vector<8x32xf32>
    %88 = arith.mulf %87, %87 : vector<8x32xf32>
    %cst_28 = arith.constant dense<0.000000e+00> : vector<8xf32>
    %89 = vector.multi_reduction <add>, %88, %cst_28 [1] : vector<8x32xf32> to vector<8xf32>
    %90 = vector.shape_cast %89 : vector<8xf32> to vector<8x1xf32>
    %cst_29 = arith.constant 3.200000e+01 : f32
    %91 = vector.broadcast %cst_29 : f32 to vector<8x1xf32>
    %92 = arith.divf %90, %91 : vector<8x1xf32>
    %93 = vector.broadcast %85 : vector<8x1xf32> to vector<8x32xf32>
    %94 = arith.subf %77, %93 : vector<8x32xf32>
    %cst_30 = arith.constant 9.99999974E-6 : f32
    %95 = vector.broadcast %cst_30 : f32 to vector<8x1xf32>
    %96 = arith.addf %92, %95 : vector<8x1xf32>
    %97 = math.rsqrt %96 : vector<8x1xf32>
    %98 = vector.broadcast %97 : vector<8x1xf32> to vector<8x32xf32>
    %99 = arith.mulf %94, %98 : vector<8x32xf32>
    %100 = vector.broadcast %79 : vector<1x32xf32> to vector<8x32xf32>
    %101 = arith.mulf %99, %100 : vector<8x32xf32>
    %102 = vector.broadcast %81 : vector<1x32xf32> to vector<8x32xf32>
    %103 = arith.addf %101, %102 : vector<8x32xf32>
    %104 = arith.truncf %103 : vector<8x32xf32> to vector<8x32xbf16>
    %c0_31 = arith.constant 0 : index
    %c0_32 = arith.constant 0 : index
    %c0_33 = arith.constant 0 : index
    %105 = vector.load %arg9[%c0_31, %c0_32, %c0_33] : memref<1x32x128xbf16, #tpu.memory_space<vmem>>, vector<1x32x128xbf16>
    %106 = vector.shape_cast %105 : vector<1x32x128xbf16> to vector<32x128xbf16>
    %cst_34 = arith.constant dense<0.000000e+00> : vector<8x128xf32>
    %107 = tpu.matmul %104, %106, %cst_34 {dimension_numbers = #tpu.dot_dimension_numbers<[1], [0], [0], [1], [0, 0, 1, 1], [], []>} : vector<8x32xbf16>, vector<32x128xbf16>, vector<8x128xf32> -> vector<8x128xf32>
    %c0_35 = arith.constant 0 : index
    %c0_36 = arith.constant 0 : index
    %c0_37 = arith.constant 0 : index
    %108 = vector.load %arg10[%c0_35, %c0_36, %c0_37] : memref<1x1x128xf32, #tpu.memory_space<vmem>>, vector<1x1x128xf32>
    %109 = vector.shape_cast %108 : vector<1x1x128xf32> to vector<1x128xf32>
    %110 = vector.broadcast %109 : vector<1x128xf32> to vector<8x128xf32>
    %111 = arith.addf %107, %110 : vector<8x128xf32>
    %cst_38 = arith.constant 5.000000e-01 : f32
    %112 = vector.broadcast %cst_38 : f32 to vector<8x128xf32>
    %113 = arith.mulf %112, %111 : vector<8x128xf32>
    %cst_39 = arith.constant 4.471500e-02 : f32
    %114 = vector.broadcast %cst_39 : f32 to vector<8x128xf32>
    %115 = arith.mulf %114, %111 : vector<8x128xf32>
    %116 = arith.mulf %115, %111 : vector<8x128xf32>
    %117 = arith.mulf %116, %111 : vector<8x128xf32>
    %118 = arith.addf %111, %117 : vector<8x128xf32>
    %cst_40 = arith.constant 0.797884583 : f32
    %119 = vector.broadcast %cst_40 : f32 to vector<8x128xf32>
    %120 = arith.mulf %119, %118 : vector<8x128xf32>
    %121 = math.tanh %120 : vector<8x128xf32>
    %cst_41 = arith.constant 1.000000e+00 : f32
    %122 = vector.broadcast %cst_41 : f32 to vector<8x128xf32>
    %123 = arith.addf %122, %121 : vector<8x128xf32>
    %124 = arith.mulf %113, %123 : vector<8x128xf32>
    %125 = arith.truncf %124 : vector<8x128xf32> to vector<8x128xbf16>
    %c0_42 = arith.constant 0 : index
    %c0_43 = arith.constant 0 : index
    %c0_44 = arith.constant 0 : index
    %126 = vector.load %arg11[%c0_42, %c0_43, %c0_44] : memref<1x128x32xbf16, #tpu.memory_space<vmem>>, vector<1x128x32xbf16>
    %127 = vector.shape_cast %126 : vector<1x128x32xbf16> to vector<128x32xbf16>
    %cst_45 = arith.constant dense<0.000000e+00> : vector<8x32xf32>
    %128 = tpu.matmul %125, %127, %cst_45 {dimension_numbers = #tpu.dot_dimension_numbers<[1], [0], [0], [1], [0, 0, 1, 1], [], []>} : vector<8x128xbf16>, vector<128x32xbf16>, vector<8x32xf32> -> vector<8x32xf32>
    %c0_46 = arith.constant 0 : index
    %c0_47 = arith.constant 0 : index
    %c0_48 = arith.constant 0 : index
    %129 = vector.load %arg12[%c0_46, %c0_47, %c0_48] : memref<1x1x32xf32, #tpu.memory_space<vmem>>, vector<1x1x32xf32>
    %130 = vector.shape_cast %129 : vector<1x1x32xf32> to vector<1x32xf32>
    %131 = vector.broadcast %130 : vector<1x32xf32> to vector<8x32xf32>
    %132 = arith.addf %128, %131 : vector<8x32xf32>
    %133 = arith.addf %103, %132 : vector<8x32xf32>
    %c0_49 = arith.constant 0 : index
    %c0_50 = arith.constant 0 : index
    %c0_51 = arith.constant 0 : index
    %134 = vector.load %arg13[%c0_49, %c0_50, %c0_51] : memref<1x1x32xf32, #tpu.memory_space<vmem>>, vector<1x1x32xf32>
    %135 = vector.shape_cast %134 : vector<1x1x32xf32> to vector<1x32xf32>
    %c0_52 = arith.constant 0 : index
    %c0_53 = arith.constant 0 : index
    %c0_54 = arith.constant 0 : index
    %136 = vector.load %arg14[%c0_52, %c0_53, %c0_54] : memref<1x1x32xf32, #tpu.memory_space<vmem>>, vector<1x1x32xf32>
    %137 = vector.shape_cast %136 : vector<1x1x32xf32> to vector<1x32xf32>
    %cst_55 = arith.constant dense<0.000000e+00> : vector<8xf32>
    %138 = vector.multi_reduction <add>, %133, %cst_55 [1] : vector<8x32xf32> to vector<8xf32>
    %139 = vector.shape_cast %138 : vector<8xf32> to vector<8x1xf32>
    %cst_56 = arith.constant 3.200000e+01 : f32
    %140 = vector.broadcast %cst_56 : f32 to vector<8x1xf32>
    %141 = arith.divf %139, %140 : vector<8x1xf32>
    %142 = vector.broadcast %141 : vector<8x1xf32> to vector<8x32xf32>
    %143 = arith.subf %133, %142 : vector<8x32xf32>
    %144 = arith.mulf %143, %143 : vector<8x32xf32>
    %cst_57 = arith.constant dense<0.000000e+00> : vector<8xf32>
    %145 = vector.multi_reduction <add>, %144, %cst_57 [1] : vector<8x32xf32> to vector<8xf32>
    %146 = vector.shape_cast %145 : vector<8xf32> to vector<8x1xf32>
    %cst_58 = arith.constant 3.200000e+01 : f32
    %147 = vector.broadcast %cst_58 : f32 to vector<8x1xf32>
    %148 = arith.divf %146, %147 : vector<8x1xf32>
    %149 = vector.broadcast %141 : vector<8x1xf32> to vector<8x32xf32>
    %150 = arith.subf %133, %149 : vector<8x32xf32>
    %cst_59 = arith.constant 9.99999974E-6 : f32
    %151 = vector.broadcast %cst_59 : f32 to vector<8x1xf32>
    %152 = arith.addf %148, %151 : vector<8x1xf32>
    %153 = math.rsqrt %152 : vector<8x1xf32>
    %154 = vector.broadcast %153 : vector<8x1xf32> to vector<8x32xf32>
    %155 = arith.mulf %150, %154 : vector<8x32xf32>
    %156 = vector.broadcast %135 : vector<1x32xf32> to vector<8x32xf32>
    %157 = arith.mulf %155, %156 : vector<8x32xf32>
    %158 = vector.broadcast %137 : vector<1x32xf32> to vector<8x32xf32>
    %159 = arith.addf %157, %158 : vector<8x32xf32>
    %160 = arith.truncf %159 : vector<8x32xf32> to vector<8x32xbf16>
    %c0_60 = arith.constant 0 : index
    %c0_61 = arith.constant 0 : index
    %161 = vector.load %arg20[%c0_60, %c0_61] : memref<8x32xbf16, #tpu.memory_space<vmem>>, vector<8x32xbf16>
    tpu.vector_store %arg20[%c0_60, %c0_61], %160 {strides = array<i32>} : memref<8x32xbf16, #tpu.memory_space<vmem>>, vector<8x32xbf16>,
    %c1_i32 = arith.constant 1 : i32
    %162 = arith.cmpi eq, %arg1, %c1_i32 : i32
    %163 = arith.extui %162 : i1 to i32
    %c0_i32_62 = arith.constant 0 : i32
    %164 = arith.cmpi ne, %163, %c0_i32_62 : i32
    scf.if %164 {
      %165 = vector.shape_cast %159 : vector<8x32xf32> to vector<1x8x32xf32>
      %166 = vector.extract_strided_slice %165 {offsets = [0, 0, 0], sizes = [1, 1, 32], strides = [1, 1, 1]} : vector<1x8x32xf32> to vector<1x1x32xf32>
      %167 = vector.shape_cast %166 : vector<1x1x32xf32> to vector<1x32xf32>
      %c0_63 = arith.constant 0 : index
      %c0_64 = arith.constant 0 : index
      %168 = vector.load %arg15[%c0_63, %c0_64] : memref<1x32xf32, #tpu.memory_space<vmem>>, vector<1x32xf32>
      %c0_65 = arith.constant 0 : index
      %c0_66 = arith.constant 0 : index
      %169 = vector.load %arg16[%c0_65, %c0_66] : memref<1x32xf32, #tpu.memory_space<vmem>>, vector<1x32xf32>
      %cst_67 = arith.constant dense<0.000000e+00> : vector<1xf32>
      %170 = vector.multi_reduction <add>, %167, %cst_67 [1] : vector<1x32xf32> to vector<1xf32>
      %171 = vector.shape_cast %170 : vector<1xf32> to vector<1x1xf32>
      %cst_68 = arith.constant 3.200000e+01 : f32
      %172 = vector.broadcast %cst_68 : f32 to vector<1x1xf32>
      %173 = arith.divf %171, %172 : vector<1x1xf32>
      %174 = vector.broadcast %173 : vector<1x1xf32> to vector<1x32xf32>
      %175 = arith.subf %167, %174 : vector<1x32xf32>
      %176 = arith.mulf %175, %175 : vector<1x32xf32>
      %cst_69 = arith.constant dense<0.000000e+00> : vector<1xf32>
      %177 = vector.multi_reduction <add>, %176, %cst_69 [1] : vector<1x32xf32> to vector<1xf32>
      %178 = vector.shape_cast %177 : vector<1xf32> to vector<1x1xf32>
      %cst_70 = arith.constant 3.200000e+01 : f32
      %179 = vector.broadcast %cst_70 : f32 to vector<1x1xf32>
      %180 = arith.divf %178, %179 : vector<1x1xf32>
      %181 = vector.broadcast %173 : vector<1x1xf32> to vector<1x32xf32>
      %182 = arith.subf %167, %181 : vector<1x32xf32>
      %cst_71 = arith.constant 9.99999974E-6 : f32
      %183 = vector.broadcast %cst_71 : f32 to vector<1x1xf32>
      %184 = arith.addf %180, %183 : vector<1x1xf32>
      %185 = math.rsqrt %184 : vector<1x1xf32>
      %186 = vector.broadcast %185 : vector<1x1xf32> to vector<1x32xf32>
      %187 = arith.mulf %182, %186 : vector<1x32xf32>
      %188 = arith.mulf %187, %168 : vector<1x32xf32>
      %189 = arith.addf %188, %169 : vector<1x32xf32>
      %c0_72 = arith.constant 0 : index
      %c0_73 = arith.constant 0 : index
      %190 = vector.load %arg17[%c0_72, %c0_73] : memref<32x128xf32, #tpu.memory_space<vmem>>, vector<32x128xf32>
      %cst_74 = arith.constant dense<0.000000e+00> : vector<1x128xf32>
      %191 = tpu.matmul %189, %190, %cst_74 {dimension_numbers = #tpu.dot_dimension_numbers<[1], [0], [0], [1], [0, 0, 1, 1], [], []>} : vector<1x32xf32>, vector<32x128xf32>, vector<1x128xf32> -> vector<1x128xf32>
      %c0_75 = arith.constant 0 : index
      %c0_76 = arith.constant 0 : index
      %192 = vector.load %arg18[%c0_75, %c0_76] : memref<1x128xf32, #tpu.memory_space<vmem>>, vector<1x128xf32>
      %193 = arith.addf %191, %192 : vector<1x128xf32>
      %c0_77 = arith.constant 0 : index
      %c0_78 = arith.constant 0 : index
      %c0_79 = arith.constant 0 : index
      %194 = vector.load %arg19[%c0_77, %c0_78, %c0_79] : memref<1x1x128xf32, #tpu.memory_space<vmem>>, vector<1x1x128xf32>
      %195 = vector.shape_cast %194 : vector<1x1x128xf32> to vector<1x128xf32>
      %196 = vector.shape_cast %193 : vector<1x128xf32> to vector<1x1x128xf32>
      tpu.vector_store %arg19[%c0_77, %c0_78, %c0_79], %196 {strides = array<i32>} : memref<1x1x128xf32, #tpu.memory_space<vmem>>, vector<1x1x128xf32>,
    } else {
    }
    return
  }
  func.func @transform_0(%arg0: i32, %arg1: i32) -> (i32, i32, i32) {
    %c0_i32 = arith.constant 0 : i32
    %c0_i32_0 = arith.constant 0 : i32
    %c0_i32_1 = arith.constant 0 : i32
    return %arg0, %c0_i32, %c0_i32_0 : i32, i32, i32
  }
  func.func @transform_1(%arg0: i32, %arg1: i32) -> (i32, i32, i32) {
    %c0_i32 = arith.constant 0 : i32
    %c0_i32_0 = arith.constant 0 : i32
    %c0_i32_1 = arith.constant 0 : i32
    return %arg1, %c0_i32, %c0_i32_0 : i32, i32, i32
  }
  func.func @transform_2(%arg0: i32, %arg1: i32) -> (i32, i32, i32) {
    %c0_i32 = arith.constant 0 : i32
    %c0_i32_0 = arith.constant 0 : i32
    %c0_i32_1 = arith.constant 0 : i32
    return %arg1, %c0_i32, %c0_i32_0 : i32, i32, i32
  }
  func.func @transform_3(%arg0: i32, %arg1: i32) -> (i32, i32, i32) {
    %c0_i32 = arith.constant 0 : i32
    %c0_i32_0 = arith.constant 0 : i32
    %c0_i32_1 = arith.constant 0 : i32
    return %arg1, %c0_i32, %c0_i32_0 : i32, i32, i32
  }
  func.func @transform_4(%arg0: i32, %arg1: i32) -> (i32, i32, i32) {
    %c0_i32 = arith.constant 0 : i32
    %c0_i32_0 = arith.constant 0 : i32
    %c0_i32_1 = arith.constant 0 : i32
    return %arg1, %c0_i32, %c0_i32_0 : i32, i32, i32
  }
  func.func @transform_5(%arg0: i32, %arg1: i32) -> (i32, i32, i32) {
    %c0_i32 = arith.constant 0 : i32
    %c0_i32_0 = arith.constant 0 : i32
    %c0_i32_1 = arith.constant 0 : i32
    return %arg1, %c0_i32, %c0_i32_0 : i32, i32, i32
  }
  func.func @transform_6(%arg0: i32, %arg1: i32) -> (i32, i32, i32) {
    %c0_i32 = arith.constant 0 : i32
    %c0_i32_0 = arith.constant 0 : i32
    %c0_i32_1 = arith.constant 0 : i32
    return %arg1, %c0_i32, %c0_i32_0 : i32, i32, i32
  }
  func.func @transform_7(%arg0: i32, %arg1: i32) -> (i32, i32, i32) {
    %c0_i32 = arith.constant 0 : i32
    %c0_i32_0 = arith.constant 0 : i32
    %c0_i32_1 = arith.constant 0 : i32
    return %arg1, %c0_i32, %c0_i32_0 : i32, i32, i32
  }
  func.func @transform_8(%arg0: i32, %arg1: i32) -> (i32, i32, i32) {
    %c0_i32 = arith.constant 0 : i32
    %c0_i32_0 = arith.constant 0 : i32
    %c0_i32_1 = arith.constant 0 : i32
    return %arg1, %c0_i32, %c0_i32_0 : i32, i32, i32
  }
  func.func @transform_9(%arg0: i32, %arg1: i32) -> (i32, i32, i32) {
    %c0_i32 = arith.constant 0 : i32
    %c0_i32_0 = arith.constant 0 : i32
    %c0_i32_1 = arith.constant 0 : i32
    return %arg1, %c0_i32, %c0_i32_0 : i32, i32, i32
  }
  func.func @transform_10(%arg0: i32, %arg1: i32) -> (i32, i32, i32) {
    %c0_i32 = arith.constant 0 : i32
    %c0_i32_0 = arith.constant 0 : i32
    %c0_i32_1 = arith.constant 0 : i32
    return %arg1, %c0_i32, %c0_i32_0 : i32, i32, i32
  }
  func.func @transform_11(%arg0: i32, %arg1: i32) -> (i32, i32, i32) {
    %c0_i32 = arith.constant 0 : i32
    %c0_i32_0 = arith.constant 0 : i32
    %c0_i32_1 = arith.constant 0 : i32
    return %arg1, %c0_i32, %c0_i32_0 : i32, i32, i32
  }
  func.func @transform_12(%arg0: i32, %arg1: i32) -> (i32, i32, i32) {
    %c0_i32 = arith.constant 0 : i32
    %c0_i32_0 = arith.constant 0 : i32
    %c0_i32_1 = arith.constant 0 : i32
    return %arg1, %c0_i32, %c0_i32_0 : i32, i32, i32
  }
  func.func @transform_13(%arg0: i32, %arg1: i32) -> (i32, i32) {
    %c0_i32 = arith.constant 0 : i32
    %c0_i32_0 = arith.constant 0 : i32
    %c0_i32_1 = arith.constant 0 : i32
    return %c0_i32, %c0_i32_0 : i32, i32
  }
  func.func @transform_14(%arg0: i32, %arg1: i32) -> (i32, i32) {
    %c0_i32 = arith.constant 0 : i32
    %c0_i32_0 = arith.constant 0 : i32
    %c0_i32_1 = arith.constant 0 : i32
    return %c0_i32, %c0_i32_0 : i32, i32
  }
  func.func @transform_15(%arg0: i32, %arg1: i32) -> (i32, i32) {
    %c0_i32 = arith.constant 0 : i32
    %c0_i32_0 = arith.constant 0 : i32
    %c0_i32_1 = arith.constant 0 : i32
    return %c0_i32, %c0_i32_0 : i32, i32
  }
  func.func @transform_16(%arg0: i32, %arg1: i32) -> (i32, i32) {
    %c0_i32 = arith.constant 0 : i32
    %c0_i32_0 = arith.constant 0 : i32
    %c0_i32_1 = arith.constant 0 : i32
    return %c0_i32, %c0_i32_0 : i32, i32
  }
  func.func @transform_17(%arg0: i32, %arg1: i32) -> (i32, i32, i32) {
    %c0_i32 = arith.constant 0 : i32
    %c0_i32_0 = arith.constant 0 : i32
    %c0_i32_1 = arith.constant 0 : i32
    return %arg0, %c0_i32, %c0_i32_0 : i32, i32, i32
  }
}

</mosaic_0001>

<llo_original>
// kernel: encoder_forward.1
$region0: #{encoder_forward.1}
  #allocation0 [shape = 'u32[]', space=smem, size = 0x4, offset = 0x4, fixed_abs, tag = 'smem constant byte address 0x4 - core index']
  #allocation1 [shape = 'u32[144,128]{1,0:T(1,128)}', space=vmem, size = 0x12000, scoped, tag = 'internal scratch']
  #allocation2 [shape = 'bf16[8,32]{1,0:T(8,128)(2,1)}', space=vmem, size = 0x800, scoped, tag = 'scratch operand']
  %s0 = inlined_call_operand.vmem [shape: bf16[2,8,32], index: 0, kind: input, shape index: {}]
  %s1 = inlined_call_operand.vmem [shape: bf16[2,32,96], index: 1, kind: input, shape index: {}]
  %s2 = inlined_call_operand.vmem [shape: f32[2,1,96], index: 2, kind: input, shape index: {}]
  %s3 = inlined_call_operand.vmem [shape: bf16[2,32,32], index: 3, kind: input, shape index: {}]
  %s4 = inlined_call_operand.vmem [shape: f32[2,1,32], index: 4, kind: input, shape index: {}]
  %s5 = inlined_call_operand.vmem [shape: f32[2,1,32], index: 5, kind: input, shape index: {}]
  %s6 = inlined_call_operand.vmem [shape: f32[2,1,32], index: 6, kind: input, shape index: {}]
  %s7 = inlined_call_operand.vmem [shape: bf16[2,32,128], index: 7, kind: input, shape index: {}]
  %s8 = inlined_call_operand.vmem [shape: f32[2,1,128], index: 8, kind: input, shape index: {}]
  %s9 = inlined_call_operand.vmem [shape: bf16[2,128,32], index: 9, kind: input, shape index: {}]
  %s10 = inlined_call_operand.vmem [shape: f32[2,1,32], index: 10, kind: input, shape index: {}]
  %s11 = inlined_call_operand.vmem [shape: f32[2,1,32], index: 11, kind: input, shape index: {}]
  %s12 = inlined_call_operand.vmem [shape: f32[2,1,32], index: 12, kind: input, shape index: {}]
  %s13 = inlined_call_operand.vmem [shape: f32[1,32], index: 13, kind: input, shape index: {}]
  %s14 = inlined_call_operand.vmem [shape: f32[1,32], index: 14, kind: input, shape index: {}]
  %s15 = inlined_call_operand.vmem [shape: f32[32,128], index: 15, kind: input, shape index: {}]
  %s16 = inlined_call_operand.vmem [shape: f32[1,128], index: 16, kind: input, shape index: {}]
  %s17 = inlined_call_operand.hbm [shape: f32[2,1,128], index: 17, kind: output, shape index: {}]
  %s18 = sld [smem:[#allocation0]]
  $region109: #{encoder_forward.1} parent=0
    _
  %s20 = ssub.s32 1, %s18
  %s21 = scalar_select 0, %s20, %s18
  $region1: #{encoder_forward.1} parent=0
    #allocation3 [shape = 'u8[1024]{0}', space=vmem, size = 0x400, scoped, tag = 'output window, operand 0']
    #allocation4 [shape = 's32[2]{0}', space=sflag, size = 0x8, scoped, tag = 'scoped memory for encoder_forward.1']
    %22 = vsyncpa [#allocation4], 0
    %s23 = scalar_lea.sflag [#allocation4], 1
    %24 = vsyncpa %s23, 0
    loop: start=0, step=1, limit=6
    $region2: #{encoder_forward.1} parent=1 // loop_pre_header
      _
    $region3: #{encoder_forward.1} parent=1 // loop_header
      %s26 = sphi 0, %s30
      %p27 = scmp.ge.s32.totalorder %s26, 6
      %s33 = sphi 0, %s45
      %s34 = sphi 0, %s41
      %s35 = sphi 0, %s33
      %s36 = sphi 0, %s34
      %s37 = sphi 0, %s35
      %s38 = sphi 0, %s36
      %s48 = sphi 0, %s50
      %s51 = sphi 0, %s48
      %s52 = sphi 0, %s51
      %s68 = sphi 0, %s52
      %s74 = sphi 0, %s76
      %s77 = sphi 0, %s74
      %s78 = sphi 0, %s77
      %s94 = sphi 0, %s78
      %s100 = sphi 0, %s102
      %s103 = sphi 0, %s100
      %s104 = sphi 0, %s103
      %s120 = sphi 0, %s104
      %s126 = sphi 0, %s128
      %s129 = sphi 0, %s126
      %s130 = sphi 0, %s129
      %s146 = sphi 0, %s130
      %s152 = sphi 0, %s154
      %s155 = sphi 0, %s152
      %s156 = sphi 0, %s155
      %s172 = sphi 0, %s156
      %s178 = sphi 0, %s180
      %s181 = sphi 0, %s178
      %s182 = sphi 0, %s181
      %s198 = sphi 0, %s182
      %s204 = sphi 0, %s206
      %s207 = sphi 0, %s204
      %s208 = sphi 0, %s207
      %s224 = sphi 0, %s208
      %s230 = sphi 0, %s232
      %s233 = sphi 0, %s230
      %s234 = sphi 0, %s233
      %s250 = sphi 0, %s234
      %s256 = sphi 0, %s258
      %s259 = sphi 0, %s256
      %s260 = sphi 0, %s259
      %s276 = sphi 0, %s260
      %s282 = sphi 0, %s284
      %s285 = sphi 0, %s282
      %s286 = sphi 0, %s285
      %s302 = sphi 0, %s286
      %s308 = sphi 0, %s310
      %s311 = sphi 0, %s308
      %s312 = sphi 0, %s311
      %s328 = sphi 0, %s312
      %s334 = sphi 0, %s336
      %s337 = sphi 0, %s334
      %s338 = sphi 0, %s337
      %s354 = sphi 0, %s338
      %s360 = sphi 0, %s362
      %s363 = sphi 0, %s360
      %s364 = sphi 0, %s363
      %s380 = sphi 0, %s364
      %s384 = sphi 0, %s384
      %s386 = sphi 0, %s384
      %s387 = sphi 0, %s386
      %s401 = sphi 0, %s387
      %s405 = sphi 0, %s405
      %s407 = sphi 0, %s405
      %s408 = sphi 0, %s407
      %s422 = sphi 0, %s408
      %s426 = sphi 0, %s426
      %s428 = sphi 0, %s426
      %s429 = sphi 0, %s428
      %s443 = sphi 0, %s429
      %s447 = sphi 0, %s447
      %s449 = sphi 0, %s447
      %s450 = sphi 0, %s449
      %s464 = sphi 0, %s450
      %s470 = sphi 0, %s472
      %s473 = sphi 0, %s470
      %s474 = sphi 0, %s473
      %s490 = sphi 0, %s474
    $region4: #{encoder_forward.1} parent=1 // loop_header_branch
      %29 = sbr.rel (%p27) target = $region8
    $region5: #{encoder_forward.1} parent=1 // loop_body
      %s31 = ssub.s32 %s26, 1
      %s32 = ssub.s32 %s26, 2
      %s39 = sadd.s32 1, %s34
      %p40 = scmp.ge.s32.totalorder %s39, 2
      %s41 = scalar_select %p40, 0, %s39
      %s42 = sadd.s32 1, %s33
      %s43 = scalar_select %p40, %s42, %s33
      %p44 = scmp.ge.s32.totalorder %s43, 2
      %s45 = scalar_select %p44, 0, %s43
      %s46 = ssub.s32 %s33, %s45
      %p47 = scmp.eq.s32.totalorder %s46, 0
      %s49 = sadd.s32 %s48, 1
      %s50 = scalar_select %p47, %s48, %s49
      %p53 = pneg %p47
      %p54 = scmp.eq.s32.totalorder %s26, 3
      %p55 = por %p53, %p54
      %p56 = scmp.ne.s32.totalorder %s48, %s51
      %p57 = scmp.eq.s32.totalorder %s26, 0
      %p58 = por %p56, %p57
      %p59 = scmp.ne.s32.totalorder %s48, %s51
      %p60 = scmp.eq.s32.totalorder %s31, 3
      %p61 = por %p59, %p60
      %p62 = scmp.ne.s32.totalorder %s51, %s52
      %p63 = scmp.eq.s32.totalorder %s31, 0
      %p64 = por %p62, %p63
      %p65 = scmp.ne.s32.totalorder %s51, %s52
      %p66 = scmp.eq.s32.totalorder %s32, 3
      %p67 = por %p65, %p66
      %p69 = scmp.ne.s32.totalorder %s52, %s68
      %p70 = scmp.eq.s32.totalorder %s32, 0
      %p71 = por %p69, %p70
      %s72 = ssub.s32 %s34, %s41
      %p73 = scmp.eq.s32.totalorder %s72, 0
      %s75 = sadd.s32 %s74, 1
      %s76 = scalar_select %p73, %s74, %s75
      %p79 = pneg %p73
      %p80 = scmp.eq.s32.totalorder %s26, 3
      %p81 = por %p79, %p80
      %p82 = scmp.ne.s32.totalorder %s74, %s77
      %p83 = scmp.eq.s32.totalorder %s26, 0
      %p84 = por %p82, %p83
      %p85 = scmp.ne.s32.totalorder %s74, %s77
      %p86 = scmp.eq.s32.totalorder %s31, 3
      %p87 = por %p85, %p86
      %p88 = scmp.ne.s32.totalorder %s77, %s78
      %p89 = scmp.eq.s32.totalorder %s31, 0
      %p90 = por %p88, %p89
      %p91 = scmp.ne.s32.totalorder %s77, %s78
      %p92 = scmp.eq.s32.totalorder %s32, 3
      %p93 = por %p91, %p92
      %p95 = scmp.ne.s32.totalorder %s78, %s94
      %p96 = scmp.eq.s32.totalorder %s32, 0
      %p97 = por %p95, %p96
      %s98 = ssub.s32 %s34, %s41
      %p99 = scmp.eq.s32.totalorder %s98, 0
      %s101 = sadd.s32 %s100, 1
      %s102 = scalar_select %p99, %s100, %s101
      %p105 = pneg %p99
      %p106 = scmp.eq.s32.totalorder %s26, 3
      %p107 = por %p105, %p106
      %p108 = scmp.ne.s32.totalorder %s100, %s103
      %p109 = scmp.eq.s32.totalorder %s26, 0
      %p110 = por %p108, %p109
      %p111 = scmp.ne.s32.totalorder %s100, %s103
      %p112 = scmp.eq.s32.totalorder %s31, 3
      %p113 = por %p111, %p112
      %p114 = scmp.ne.s32.totalorder %s103, %s104
      %p115 = scmp.eq.s32.totalorder %s31, 0
      %p116 = por %p114, %p115
      %p117 = scmp.ne.s32.totalorder %s103, %s104
      %p118 = scmp.eq.s32.totalorder %s32, 3
      %p119 = por %p117, %p118
      %p121 = scmp.ne.s32.totalorder %s104, %s120
      %p122 = scmp.eq.s32.totalorder %s32, 0
      %p123 = por %p121, %p122
      %s124 = ssub.s32 %s34, %s41
      %p125 = scmp.eq.s32.totalorder %s124, 0
      %s127 = sadd.s32 %s126, 1
      %s128 = scalar_select %p125, %s126, %s127
      %p131 = pneg %p125
      %p132 = scmp.eq.s32.totalorder %s26, 3
      %p133 = por %p131, %p132
      %p134 = scmp.ne.s32.totalorder %s126, %s129
      %p135 = scmp.eq.s32.totalorder %s26, 0
      %p136 = por %p134, %p135
      %p137 = scmp.ne.s32.totalorder %s126, %s129
      %p138 = scmp.eq.s32.totalorder %s31, 3
      %p139 = por %p137, %p138
      %p140 = scmp.ne.s32.totalorder %s129, %s130
      %p141 = scmp.eq.s32.totalorder %s31, 0
      %p142 = por %p140, %p141
      %p143 = scmp.ne.s32.totalorder %s129, %s130
      %p144 = scmp.eq.s32.totalorder %s32, 3
      %p145 = por %p143, %p144
      %p147 = scmp.ne.s32.totalorder %s130, %s146
      %p148 = scmp.eq.s32.totalorder %s32, 0
      %p149 = por %p147, %p148
      %s150 = ssub.s32 %s34, %s41
      %p151 = scmp.eq.s32.totalorder %s150, 0
      %s153 = sadd.s32 %s152, 1
      %s154 = scalar_select %p151, %s152, %s153
      %p157 = pneg %p151
      %p158 = scmp.eq.s32.totalorder %s26, 3
      %p159 = por %p157, %p158
      %p160 = scmp.ne.s32.totalorder %s152, %s155
      %p161 = scmp.eq.s32.totalorder %s26, 0
      %p162 = por %p160, %p161
      %p163 = scmp.ne.s32.totalorder %s152, %s155
      %p164 = scmp.eq.s32.totalorder %s31, 3
      %p165 = por %p163, %p164
      %p166 = scmp.ne.s32.totalorder %s155, %s156
      %p167 = scmp.eq.s32.totalorder %s31, 0
      %p168 = por %p166, %p167
      %p169 = scmp.ne.s32.totalorder %s155, %s156
      %p170 = scmp.eq.s32.totalorder %s32, 3
      %p171 = por %p169, %p170
      %p173 = scmp.ne.s32.totalorder %s156, %s172
      %p174 = scmp.eq.s32.totalorder %s32, 0
      %p175 = por %p173, %p174
      %s176 = ssub.s32 %s34, %s41
      %p177 = scmp.eq.s32.totalorder %s176, 0
      %s179 = sadd.s32 %s178, 1
      %s180 = scalar_select %p177, %s178, %s179
      %p183 = pneg %p177
      %p184 = scmp.eq.s32.totalorder %s26, 3
      %p185 = por %p183, %p184
      %p186 = scmp.ne.s32.totalorder %s178, %s181
      %p187 = scmp.eq.s32.totalorder %s26, 0
      %p188 = por %p186, %p187
      %p189 = scmp.ne.s32.totalorder %s178, %s181
      %p190 = scmp.eq.s32.totalorder %s31, 3
      %p191 = por %p189, %p190
      %p192 = scmp.ne.s32.totalorder %s181, %s182
      %p193 = scmp.eq.s32.totalorder %s31, 0
      %p194 = por %p192, %p193
      %p195 = scmp.ne.s32.totalorder %s181, %s182
      %p196 = scmp.eq.s32.totalorder %s32, 3
      %p197 = por %p195, %p196
      %p199 = scmp.ne.s32.totalorder %s182, %s198
      %p200 = scmp.eq.s32.totalorder %s32, 0
      %p201 = por %p199, %p200
      %s202 = ssub.s32 %s34, %s41
      %p203 = scmp.eq.s32.totalorder %s202, 0
      %s205 = sadd.s32 %s204, 1
      %s206 = scalar_select %p203, %s204, %s205
      %p209 = pneg %p203
      %p210 = scmp.eq.s32.totalorder %s26, 3
      %p211 = por %p209, %p210
      %p212 = scmp.ne.s32.totalorder %s204, %s207
      %p213 = scmp.eq.s32.totalorder %s26, 0
      %p214 = por %p212, %p213
      %p215 = scmp.ne.s32.totalorder %s204, %s207
      %p216 = scmp.eq.s32.totalorder %s31, 3
      %p217 = por %p215, %p216
      %p218 = scmp.ne.s32.totalorder %s207, %s208
      %p219 = scmp.eq.s32.totalorder %s31, 0
      %p220 = por %p218, %p219
      %p221 = scmp.ne.s32.totalorder %s207, %s208
      %p222 = scmp.eq.s32.totalorder %s32, 3
      %p223 = por %p221, %p222
      %p225 = scmp.ne.s32.totalorder %s208, %s224
      %p226 = scmp.eq.s32.totalorder %s32, 0
      %p227 = por %p225, %p226
      %s228 = ssub.s32 %s34, %s41
      %p229 = scmp.eq.s32.totalorder %s228, 0
      %s231 = sadd.s32 %s230, 1
      %s232 = scalar_select %p229, %s230, %s231
      %p235 = pneg %p229
      %p236 = scmp.eq.s32.totalorder %s26, 3
      %p237 = por %p235, %p236
      %p238 = scmp.ne.s32.totalorder %s230, %s233
      %p239 = scmp.eq.s32.totalorder %s26, 0
      %p240 = por %p238, %p239
      %p241 = scmp.ne.s32.totalorder %s230, %s233
      %p242 = scmp.eq.s32.totalorder %s31, 3
      %p243 = por %p241, %p242
      %p244 = scmp.ne.s32.totalorder %s233, %s234
      %p245 = scmp.eq.s32.totalorder %s31, 0
      %p246 = por %p244, %p245
      %p247 = scmp.ne.s32.totalorder %s233, %s234
      %p248 = scmp.eq.s32.totalorder %s32, 3
      %p249 = por %p247, %p248
      %p251 = scmp.ne.s32.totalorder %s234, %s250
      %p252 = scmp.eq.s32.totalorder %s32, 0
      %p253 = por %p251, %p252
      %s254 = ssub.s32 %s34, %s41
      %p255 = scmp.eq.s32.totalorder %s254, 0
      %s257 = sadd.s32 %s256, 1
      %s258 = scalar_select %p255, %s256, %s257
      %p261 = pneg %p255
      %p262 = scmp.eq.s32.totalorder %s26, 3
      %p263 = por %p261, %p262
      %p264 = scmp.ne.s32.totalorder %s256, %s259
      %p265 = scmp.eq.s32.totalorder %s26, 0
      %p266 = por %p264, %p265
      %p267 = scmp.ne.s32.totalorder %s256, %s259
      %p268 = scmp.eq.s32.totalorder %s31, 3
      %p269 = por %p267, %p268
      %p270 = scmp.ne.s32.totalorder %s259, %s260
      %p271 = scmp.eq.s32.totalorder %s31, 0
      %p272 = por %p270, %p271
      %p273 = scmp.ne.s32.totalorder %s259, %s260
      %p274 = scmp.eq.s32.totalorder %s32, 3
      %p275 = por %p273, %p274
      %p277 = scmp.ne.s32.totalorder %s260, %s276
      %p278 = scmp.eq.s32.totalorder %s32, 0
      %p279 = por %p277, %p278
      %s280 = ssub.s32 %s34, %s41
      %p281 = scmp.eq.s32.totalorder %s280, 0
      %s283 = sadd.s32 %s282, 1
      %s284 = scalar_select %p281, %s282, %s283
      %p287 = pneg %p281
      %p288 = scmp.eq.s32.totalorder %s26, 3
      %p289 = por %p287, %p288
      %p290 = scmp.ne.s32.totalorder %s282, %s285
      %p291 = scmp.eq.s32.totalorder %s26, 0
      %p292 = por %p290, %p291
      %p293 = scmp.ne.s32.totalorder %s282, %s285
      %p294 = scmp.eq.s32.totalorder %s31, 3
      %p295 = por %p293, %p294
      %p296 = scmp.ne.s32.totalorder %s285, %s286
      %p297 = scmp.eq.s32.totalorder %s31, 0
      %p298 = por %p296, %p297
      %p299 = scmp.ne.s32.totalorder %s285, %s286
      %p300 = scmp.eq.s32.totalorder %s32, 3
      %p301 = por %p299, %p300
      %p303 = scmp.ne.s32.totalorder %s286, %s302
      %p304 = scmp.eq.s32.totalorder %s32, 0
      %p305 = por %p303, %p304
      %s306 = ssub.s32 %s34, %s41
      %p307 = scmp.eq.s32.totalorder %s306, 0
      %s309 = sadd.s32 %s308, 1
      %s310 = scalar_select %p307, %s308, %s309
      %p313 = pneg %p307
      %p314 = scmp.eq.s32.totalorder %s26, 3
      %p315 = por %p313, %p314
      %p316 = scmp.ne.s32.totalorder %s308, %s311
      %p317 = scmp.eq.s32.totalorder %s26, 0
      %p318 = por %p316, %p317
      %p319 = scmp.ne.s32.totalorder %s308, %s311
      %p320 = scmp.eq.s32.totalorder %s31, 3
      %p321 = por %p319, %p320
      %p322 = scmp.ne.s32.totalorder %s311, %s312
      %p323 = scmp.eq.s32.totalorder %s31, 0
      %p324 = por %p322, %p323
      %p325 = scmp.ne.s32.totalorder %s311, %s312
      %p326 = scmp.eq.s32.totalorder %s32, 3
      %p327 = por %p325, %p326
      %p329 = scmp.ne.s32.totalorder %s312, %s328
      %p330 = scmp.eq.s32.totalorder %s32, 0
      %p331 = por %p329, %p330
      %s332 = ssub.s32 %s34, %s41
      %p333 = scmp.eq.s32.totalorder %s332, 0
      %s335 = sadd.s32 %s334, 1
      %s336 = scalar_select %p333, %s334, %s335
      %p339 = pneg %p333
      %p340 = scmp.eq.s32.totalorder %s26, 3
      %p341 = por %p339, %p340
      %p342 = scmp.ne.s32.totalorder %s334, %s337
      %p343 = scmp.eq.s32.totalorder %s26, 0
      %p344 = por %p342, %p343
      %p345 = scmp.ne.s32.totalorder %s334, %s337
      %p346 = scmp.eq.s32.totalorder %s31, 3
      %p347 = por %p345, %p346
      %p348 = scmp.ne.s32.totalorder %s337, %s338
      %p349 = scmp.eq.s32.totalorder %s31, 0
      %p350 = por %p348, %p349
      %p351 = scmp.ne.s32.totalorder %s337, %s338
      %p352 = scmp.eq.s32.totalorder %s32, 3
      %p353 = por %p351, %p352
      %p355 = scmp.ne.s32.totalorder %s338, %s354
      %p356 = scmp.eq.s32.totalorder %s32, 0
      %p357 = por %p355, %p356
      %s358 = ssub.s32 %s34, %s41
      %p359 = scmp.eq.s32.totalorder %s358, 0
      %s361 = sadd.s32 %s360, 1
      %s362 = scalar_select %p359, %s360, %s361
      %p365 = pneg %p359
      %p366 = scmp.eq.s32.totalorder %s26, 3
      %p367 = por %p365, %p366
      %p368 = scmp.ne.s32.totalorder %s360, %s363
      %p369 = scmp.eq.s32.totalorder %s26, 0
      %p370 = por %p368, %p369
      %p371 = scmp.ne.s32.totalorder %s360, %s363
      %p372 = scmp.eq.s32.totalorder %s31, 3
      %p373 = por %p371, %p372
      %p374 = scmp.ne.s32.totalorder %s363, %s364
      %p375 = scmp.eq.s32.totalorder %s31, 0
      %p376 = por %p374, %p375
      %p377 = scmp.ne.s32.totalorder %s363, %s364
      %p378 = scmp.eq.s32.totalorder %s32, 3
      %p379 = por %p377, %p378
      %p381 = scmp.ne.s32.totalorder %s364, %s380
      %p382 = scmp.eq.s32.totalorder %s32, 0
      %p383 = por %p381, %p382
      %s385 = sadd.s32 %s384, 1
      %p388 = scmp.eq.s32.totalorder %s26, 3
      %p389 = scmp.ne.s32.totalorder %s384, %s386
      %p390 = scmp.eq.s32.totalorder %s26, 0
      %p391 = por %p389, %p390
      %p392 = scmp.ne.s32.totalorder %s384, %s386
      %p393 = scmp.eq.s32.totalorder %s31, 3
      %p394 = por %p392, %p393
      %p395 = scmp.ne.s32.totalorder %s386, %s387
      %p396 = scmp.eq.s32.totalorder %s31, 0
      %p397 = por %p395, %p396
      %p398 = scmp.ne.s32.totalorder %s386, %s387
      %p399 = scmp.eq.s32.totalorder %s32, 3
      %p400 = por %p398, %p399
      %p402 = scmp.ne.s32.totalorder %s387, %s401
      %p403 = scmp.eq.s32.totalorder %s32, 0
      %p404 = por %p402, %p403
      %s406 = sadd.s32 %s405, 1
      %p409 = scmp.eq.s32.totalorder %s26, 3
      %p410 = scmp.ne.s32.totalorder %s405, %s407
      %p411 = scmp.eq.s32.totalorder %s26, 0
      %p412 = por %p410, %p411
      %p413 = scmp.ne.s32.totalorder %s405, %s407
      %p414 = scmp.eq.s32.totalorder %s31, 3
      %p415 = por %p413, %p414
      %p416 = scmp.ne.s32.totalorder %s407, %s408
      %p417 = scmp.eq.s32.totalorder %s31, 0
      %p418 = por %p416, %p417
      %p419 = scmp.ne.s32.totalorder %s407, %s408
      %p420 = scmp.eq.s32.totalorder %s32, 3
      %p421 = por %p419, %p420
      %p423 = scmp.ne.s32.totalorder %s408, %s422
      %p424 = scmp.eq.s32.totalorder %s32, 0
      %p425 = por %p423, %p424
      %s427 = sadd.s32 %s426, 1
      %p430 = scmp.eq.s32.totalorder %s26, 3
      %p431 = scmp.ne.s32.totalorder %s426, %s428
      %p432 = scmp.eq.s32.totalorder %s26, 0
      %p433 = por %p431, %p432
      %p434 = scmp.ne.s32.totalorder %s426, %s428
      %p435 = scmp.eq.s32.totalorder %s31, 3
      %p436 = por %p434, %p435
      %p437 = scmp.ne.s32.totalorder %s428, %s429
      %p438 = scmp.eq.s32.totalorder %s31, 0
      %p439 = por %p437, %p438
      %p440 = scmp.ne.s32.totalorder %s428, %s429
      %p441 = scmp.eq.s32.totalorder %s32, 3
      %p442 = por %p440, %p441
      %p444 = scmp.ne.s32.totalorder %s429, %s443
      %p445 = scmp.eq.s32.totalorder %s32, 0
      %p446 = por %p444, %p445
      %s448 = sadd.s32 %s447, 1
      %p451 = scmp.eq.s32.totalorder %s26, 3
      %p452 = scmp.ne.s32.totalorder %s447, %s449
      %p453 = scmp.eq.s32.totalorder %s26, 0
      %p454 = por %p452, %p453
      %p455 = scmp.ne.s32.totalorder %s447, %s449
      %p456 = scmp.eq.s32.totalorder %s31, 3
      %p457 = por %p455, %p456
      %p458 = scmp.ne.s32.totalorder %s449, %s450
      %p459 = scmp.eq.s32.totalorder %s31, 0
      %p460 = por %p458, %p459
      %p461 = scmp.ne.s32.totalorder %s449, %s450
      %p462 = scmp.eq.s32.totalorder %s32, 3
      %p463 = por %p461, %p462
      %p465 = scmp.ne.s32.totalorder %s450, %s464
      %p466 = scmp.eq.s32.totalorder %s32, 0
      %p467 = por %p465, %p466
      %s468 = ssub.s32 %s33, %s45
      %p469 = scmp.eq.s32.totalorder %s468, 0
      %s471 = sadd.s32 %s470, 1
      %s472 = scalar_select %p469, %s470, %s471
      %p475 = pneg %p469
      %p476 = scmp.eq.s32.totalorder %s26, 3
      %p477 = por %p475, %p476
      %p478 = scmp.ne.s32.totalorder %s470, %s473
      %p479 = scmp.eq.s32.totalorder %s26, 0
      %p480 = por %p478, %p479
      %p481 = scmp.ne.s32.totalorder %s470, %s473
      %p482 = scmp.eq.s32.totalorder %s31, 3
      %p483 = por %p481, %p482
      %p484 = scmp.ne.s32.totalorder %s473, %s474
      %p485 = scmp.eq.s32.totalorder %s31, 0
      %p486 = por %p484, %p485
      %p487 = scmp.ne.s32.totalorder %s473, %s474
      %p488 = scmp.eq.s32.totalorder %s32, 3
      %p489 = por %p487, %p488
      %p491 = scmp.ne.s32.totalorder %s474, %s490
      %p492 = scmp.eq.s32.totalorder %s32, 0
      %p493 = por %p491, %p492
      %p494 = scmp.le.s32.totalorder 1, %s26
      %p495 = scmp.lt.s32.totalorder %s26, 5
      %p496 = pnand %p494, %p495
      %p497 = pneg %p496
      // Predicated region
      $region9: #{encoder_forward.1} parent=5 // pred_check
        _
      $region10: #{encoder_forward.1} parent=5 // pred_check_branch
        %499 = sbr.rel (%p496) target = $region12
      $region11: #{encoder_forward.1} parent=5 // pred_region
        %s500 = ssub.s32 %s26, 1
        // Predicated region
        $region13: #{encoder_forward.1} parent=11 // pred_check
          %p501 = pneg %p397
        $region14: #{encoder_forward.1} parent=11 // pred_check_branch
          %503 = sbr.rel (%p501) target = $region16
        $region15: #{encoder_forward.1} parent=11 // pred_region
          _
        $region16: #{encoder_forward.1} parent=11 // pred_fallthru
          _
        // Predicated region
        $region17: #{encoder_forward.1} parent=11 // pred_check
          %p504 = pneg %p418
        $region18: #{encoder_forward.1} parent=11 // pred_check_branch
          %506 = sbr.rel (%p504) target = $region20
        $region19: #{encoder_forward.1} parent=11 // pred_region
          _
        $region20: #{encoder_forward.1} parent=11 // pred_fallthru
          _
        // Predicated region
        $region21: #{encoder_forward.1} parent=11 // pred_check
          %p507 = pneg %p439
        $region22: #{encoder_forward.1} parent=11 // pred_check_branch
          %509 = sbr.rel (%p507) target = $region24
        $region23: #{encoder_forward.1} parent=11 // pred_region
          _
        $region24: #{encoder_forward.1} parent=11 // pred_fallthru
          _
        // Predicated region
        $region25: #{encoder_forward.1} parent=11 // pred_check
          %p510 = pneg %p460
        $region26: #{encoder_forward.1} parent=11 // pred_check_branch
          %512 = sbr.rel (%p510) target = $region28
        $region27: #{encoder_forward.1} parent=11 // pred_region
          _
        $region28: #{encoder_forward.1} parent=11 // pred_fallthru
          _
      $region12: #{encoder_forward.1} parent=5 // pred_fallthru
        _
      %p513 = scmp.lt.s32.totalorder %s26, 4
      // Predicated region
      $region29: #{encoder_forward.1} parent=5 // pred_check
        %p514 = pneg %p513
      $region30: #{encoder_forward.1} parent=5 // pred_check_branch
        %516 = sbr.rel (%p514) target = $region32
      $region31: #{encoder_forward.1} parent=5 // pred_region
        // Predicated region
        $region33: #{encoder_forward.1} parent=31 // pred_check
          %p517 = pneg %p58
        $region34: #{encoder_forward.1} parent=31 // pred_check_branch
          %519 = sbr.rel (%p517) target = $region36
        $region35: #{encoder_forward.1} parent=31 // pred_region
          %p520 = scmp.lt.s32.totalorder %s33, 1
          %s521 = scalar_select %p520, %s33, 1
          %s522 = smul.addr %s521, 4
          %s523 = scalar_lea.vmem %s0, %s522
        $region36: #{encoder_forward.1} parent=31 // pred_fallthru
          _
        // Predicated region
        $region37: #{encoder_forward.1} parent=31 // pred_check
          %p524 = pneg %p84
        $region38: #{encoder_forward.1} parent=31 // pred_check_branch
          %526 = sbr.rel (%p524) target = $region40
        $region39: #{encoder_forward.1} parent=31 // pred_region
          %p527 = scmp.lt.s32.totalorder %s34, 1
          %s528 = scalar_select %p527, %s34, 1
          %s529 = smul.addr %s528, 4
          %s530 = smul.addr %s529, 4
          %s531 = scalar_lea.vmem %s1, %s530
        $region40: #{encoder_forward.1} parent=31 // pred_fallthru
          _
        // Predicated region
        $region41: #{encoder_forward.1} parent=31 // pred_check
          %p532 = pneg %p110
        $region42: #{encoder_forward.1} parent=31 // pred_check_branch
          %534 = sbr.rel (%p532) target = $region44
        $region43: #{encoder_forward.1} parent=31 // pred_region
          %p535 = scmp.lt.s32.totalorder %s34, 1
          %s536 = scalar_select %p535, %s34, 1
          %s537 = scalar_lea.vmem %s2, %s536
        $region44: #{encoder_forward.1} parent=31 // pred_fallthru
          _
        // Predicated region
        $region45: #{encoder_forward.1} parent=31 // pred_check
          %p538 = pneg %p136
        $region46: #{encoder_forward.1} parent=31 // pred_check_branch
          %540 = sbr.rel (%p538) target = $region48
        $region47: #{encoder_forward.1} parent=31 // pred_region
          %p541 = scmp.lt.s32.totalorder %s34, 1
          %s542 = scalar_select %p541, %s34, 1
          %s543 = smul.addr %s542, 4
          %s544 = smul.addr %s543, 4
          %s545 = scalar_lea.vmem %s3, %s544
        $region48: #{encoder_forward.1} parent=31 // pred_fallthru
          _
        // Predicated region
        $region49: #{encoder_forward.1} parent=31 // pred_check
          %p546 = pneg %p162
        $region50: #{encoder_forward.1} parent=31 // pred_check_branch
          %548 = sbr.rel (%p546) target = $region52
        $region51: #{encoder_forward.1} parent=31 // pred_region
          %p549 = scmp.lt.s32.totalorder %s34, 1
          %s550 = scalar_select %p549, %s34, 1
          %s551 = scalar_lea.vmem %s4, %s550
        $region52: #{encoder_forward.1} parent=31 // pred_fallthru
          _
        // Predicated region
        $region53: #{encoder_forward.1} parent=31 // pred_check
          %p552 = pneg %p188
        $region54: #{encoder_forward.1} parent=31 // pred_check_branch
          %554 = sbr.rel (%p552) target = $region56
        $region55: #{encoder_forward.1} parent=31 // pred_region
          %p555 = scmp.lt.s32.totalorder %s34, 1
          %s556 = scalar_select %p555, %s34, 1
          %s557 = scalar_lea.vmem %s5, %s556
        $region56: #{encoder_forward.1} parent=31 // pred_fallthru
          _
        // Predicated region
        $region57: #{encoder_forward.1} parent=31 // pred_check
          %p558 = pneg %p214
        $region58: #{encoder_forward.1} parent=31 // pred_check_branch
          %560 = sbr.rel (%p558) target = $region60
        $region59: #{encoder_forward.1} parent=31 // pred_region
          %p561 = scmp.lt.s32.totalorder %s34, 1
          %s562 = scalar_select %p561, %s34, 1
          %s563 = scalar_lea.vmem %s6, %s562
        $region60: #{encoder_forward.1} parent=31 // pred_fallthru
          _
        // Predicated region
        $region61: #{encoder_forward.1} parent=31 // pred_check
          %p564 = pneg %p240
        $region62: #{encoder_forward.1} parent=31 // pred_check_branch
          %566 = sbr.rel (%p564) target = $region64
        $region63: #{encoder_forward.1} parent=31 // pred_region
          %p567 = scmp.lt.s32.totalorder %s34, 1
          %s568 = scalar_select %p567, %s34, 1
          %s569 = smul.addr %s568, 4
          %s570 = smul.addr %s569, 4
          %s571 = scalar_lea.vmem %s7, %s570
        $region64: #{encoder_forward.1} parent=31 // pred_fallthru
          _
        // Predicated region
        $region65: #{encoder_forward.1} parent=31 // pred_check
          %p572 = pneg %p266
        $region66: #{encoder_forward.1} parent=31 // pred_check_branch
          %574 = sbr.rel (%p572) target = $region68
        $region67: #{encoder_forward.1} parent=31 // pred_region
          %p575 = scmp.lt.s32.totalorder %s34, 1
          %s576 = scalar_select %p575, %s34, 1
          %s577 = scalar_lea.vmem %s8, %s576
        $region68: #{encoder_forward.1} parent=31 // pred_fallthru
          _
        // Predicated region
        $region69: #{encoder_forward.1} parent=31 // pred_check
          %p578 = pneg %p292
        $region70: #{encoder_forward.1} parent=31 // pred_check_branch
          %580 = sbr.rel (%p578) target = $region72
        $region71: #{encoder_forward.1} parent=31 // pred_region
          %p581 = scmp.lt.s32.totalorder %s34, 1
          %s582 = scalar_select %p581, %s34, 1
          %s583 = smul.addr %s582, 16
          %s584 = smul.addr %s583, 4
          %s585 = scalar_lea.vmem %s9, %s584
        $region72: #{encoder_forward.1} parent=31 // pred_fallthru
          _
        // Predicated region
        $region73: #{encoder_forward.1} parent=31 // pred_check
          %p586 = pneg %p318
        $region74: #{encoder_forward.1} parent=31 // pred_check_branch
          %588 = sbr.rel (%p586) target = $region76
        $region75: #{encoder_forward.1} parent=31 // pred_region
          %p589 = scmp.lt.s32.totalorder %s34, 1
          %s590 = scalar_select %p589, %s34, 1
          %s591 = scalar_lea.vmem %s10, %s590
        $region76: #{encoder_forward.1} parent=31 // pred_fallthru
          _
        // Predicated region
        $region77: #{encoder_forward.1} parent=31 // pred_check
          %p592 = pneg %p344
        $region78: #{encoder_forward.1} parent=31 // pred_check_branch
          %594 = sbr.rel (%p592) target = $region80
        $region79: #{encoder_forward.1} parent=31 // pred_region
          %p595 = scmp.lt.s32.totalorder %s34, 1
          %s596 = scalar_select %p595, %s34, 1
          %s597 = scalar_lea.vmem %s11, %s596
        $region80: #{encoder_forward.1} parent=31 // pred_fallthru
          _
        // Predicated region
        $region81: #{encoder_forward.1} parent=31 // pred_check
          %p598 = pneg %p370
        $region82: #{encoder_forward.1} parent=31 // pred_check_branch
          %600 = sbr.rel (%p598) target = $region84
        $region83: #{encoder_forward.1} parent=31 // pred_region
          %p601 = scmp.lt.s32.totalorder %s34, 1
          %s602 = scalar_select %p601, %s34, 1
          %s603 = scalar_lea.vmem %s12, %s602
        $region84: #{encoder_forward.1} parent=31 // pred_fallthru
          _
      $region32: #{encoder_forward.1} parent=5 // pred_fallthru
        _
      %p604 = scmp.le.s32.totalorder 1, %s26
      %p605 = scmp.lt.s32.totalorder %s26, 5
      %p606 = pnand %p604, %p605
      %p607 = pneg %p606
      // Predicated region
      $region85: #{encoder_forward.1} parent=5 // pred_check
        _
      $region86: #{encoder_forward.1} parent=5 // pred_check_branch
        %609 = sbr.rel (%p606) target = $region88
      $region87: #{encoder_forward.1} parent=5 // pred_region
        %s610 = ssub.s32 %s26, 1
        %p611 = scmp.lt.s32.totalorder %s35, 1
        %s612 = scalar_select %p611, %s35, 1
        %s613 = smul.addr %s612, 4
        %s614 = scalar_lea.vmem %s0, %s613
        %p615 = pneg %p64
        %p616 = pneg %p61
        %p617 = scmp.lt.s32.totalorder %s36, 1
        %s618 = scalar_select %p617, %s36, 1
        %s619 = smul.addr %s618, 4
        %s620 = smul.addr %s619, 4
        %s621 = scalar_lea.vmem %s1, %s620
        %p622 = pneg %p90
        %p623 = pneg %p87
        %p624 = scmp.lt.s32.totalorder %s36, 1
        %s625 = scalar_select %p624, %s36, 1
        %s626 = scalar_lea.vmem %s2, %s625
        %p627 = pneg %p116
        %p628 = pneg %p113
        %p629 = scmp.lt.s32.totalorder %s36, 1
        %s630 = scalar_select %p629, %s36, 1
        %s631 = smul.addr %s630, 4
        %s632 = smul.addr %s631, 4
        %s633 = scalar_lea.vmem %s3, %s632
        %p634 = pneg %p142
        %p635 = pneg %p139
        %p636 = scmp.lt.s32.totalorder %s36, 1
        %s637 = scalar_select %p636, %s36, 1
        %s638 = scalar_lea.vmem %s4, %s637
        %p639 = pneg %p168
        %p640 = pneg %p165
        %p641 = scmp.lt.s32.totalorder %s36, 1
        %s642 = scalar_select %p641, %s36, 1
        %s643 = scalar_lea.vmem %s5, %s642
        %p644 = pneg %p194
        %p645 = pneg %p191
        %p646 = scmp.lt.s32.totalorder %s36, 1
        %s647 = scalar_select %p646, %s36, 1
        %s648 = scalar_lea.vmem %s6, %s647
        %p649 = pneg %p220
        %p650 = pneg %p217
        %p651 = scmp.lt.s32.totalorder %s36, 1
        %s652 = scalar_select %p651, %s36, 1
        %s653 = smul.addr %s652, 4
        %s654 = smul.addr %s653, 4
        %s655 = scalar_lea.vmem %s7, %s654
        %p656 = pneg %p246
        %p657 = pneg %p243
        %p658 = scmp.lt.s32.totalorder %s36, 1
        %s659 = scalar_select %p658, %s36, 1
        %s660 = scalar_lea.vmem %s8, %s659
        %p661 = pneg %p272
        %p662 = pneg %p269
        %p663 = scmp.lt.s32.totalorder %s36, 1
        %s664 = scalar_select %p663, %s36, 1
        %s665 = smul.addr %s664, 16
        %s666 = smul.addr %s665, 4
        %s667 = scalar_lea.vmem %s9, %s666
        %p668 = pneg %p298
        %p669 = pneg %p295
        %p670 = scmp.lt.s32.totalorder %s36, 1
        %s671 = scalar_select %p670, %s36, 1
        %s672 = scalar_lea.vmem %s10, %s671
        %p673 = pneg %p324
        %p674 = pneg %p321
        %p675 = scmp.lt.s32.totalorder %s36, 1
        %s676 = scalar_select %p675, %s36, 1
        %s677 = scalar_lea.vmem %s11, %s676
        %p678 = pneg %p350
        %p679 = pneg %p347
        %p680 = scmp.lt.s32.totalorder %s36, 1
        %s681 = scalar_select %p680, %s36, 1
        %s682 = scalar_lea.vmem %s12, %s681
        %p683 = pneg %p376
        %p684 = pneg %p373
        %p685 = pneg %p397
        %p686 = pneg %p394
        %p687 = pneg %p418
        %p688 = pneg %p415
        %p689 = pneg %p439
        %p690 = pneg %p436
        %p691 = pneg %p460
        %p692 = pneg %p457
        %p693 = pneg %p486
        %p694 = pneg %p483
        %s695 = sand.u32 %s473, 1
        %s696 = scalar_lea.sflag [#allocation4], %s695
        %s697 = sand.u32 %s473, 1
        %s698 = scalar_lea.vmem [#allocation3], %s697
        %p699 = scmp.lt.s32.totalorder %s35, 1
        %s700 = scalar_select %p699, %s35, 1
        %s701 = smul.addr %s700, 4
        %s702 = scalar_lea.vmem %s0, %s701
        %p703 = scmp.lt.s32.totalorder %s36, 1
        %s704 = scalar_select %p703, %s36, 1
        %s705 = smul.addr %s704, 4
        %s706 = smul.addr %s705, 4
        %s707 = scalar_lea.vmem %s1, %s706
        %p708 = scmp.lt.s32.totalorder %s36, 1
        %s709 = scalar_select %p708, %s36, 1
        %s710 = scalar_lea.vmem %s2, %s709
        %p711 = scmp.lt.s32.totalorder %s36, 1
        %s712 = scalar_select %p711, %s36, 1
        %s713 = smul.addr %s712, 4
        %s714 = smul.addr %s713, 4
        %s715 = scalar_lea.vmem %s3, %s714
        %p716 = scmp.lt.s32.totalorder %s36, 1
        %s717 = scalar_select %p716, %s36, 1
        %s718 = scalar_lea.vmem %s4, %s717
        %p719 = scmp.lt.s32.totalorder %s36, 1
        %s720 = scalar_select %p719, %s36, 1
        %s721 = scalar_lea.vmem %s5, %s720
        %p722 = scmp.lt.s32.totalorder %s36, 1
        %s723 = scalar_select %p722, %s36, 1
        %s724 = scalar_lea.vmem %s6, %s723
        %p725 = scmp.lt.s32.totalorder %s36, 1
        %s726 = scalar_select %p725, %s36, 1
        %s727 = smul.addr %s726, 4
        %s728 = smul.addr %s727, 4
        %s729 = scalar_lea.vmem %s7, %s728
        %p730 = scmp.lt.s32.totalorder %s36, 1
        %s731 = scalar_select %p730, %s36, 1
        %s732 = scalar_lea.vmem %s8, %s731
        %p733 = scmp.lt.s32.totalorder %s36, 1
        %s734 = scalar_select %p733, %s36, 1
        %s735 = smul.addr %s734, 16
        %s736 = smul.addr %s735, 4
        %s737 = scalar_lea.vmem %s9, %s736
        %p738 = scmp.lt.s32.totalorder %s36, 1
        %s739 = scalar_select %p738, %s36, 1
        %s740 = scalar_lea.vmem %s10, %s739
        %p741 = scmp.lt.s32.totalorder %s36, 1
        %s742 = scalar_select %p741, %s36, 1
        %s743 = scalar_lea.vmem %s11, %s742
        %p744 = scmp.lt.s32.totalorder %s36, 1
        %s745 = scalar_select %p744, %s36, 1
        %s746 = scalar_lea.vmem %s12, %s745
        %p748 = scmp.eq.s32.totalorder %s36, 0
        // Predicated region
        $region89: #{encoder_forward.1} parent=87 // pred_check
          %p749 = pneg %p748
        $region90: #{encoder_forward.1} parent=87 // pred_check_branch
          %751 = sbr.rel (%p749) target = $region92
        $region91: #{encoder_forward.1} parent=87 // pred_region
          %v752 = vld [vmem:[%s702] sm:$0xf]
          %vm753 = vcmask 257024
          %754 = vst.msk [vmem:[#allocation2] sm:$0xf] %vm753, %v752
        $region92: #{encoder_forward.1} parent=87 // pred_fallthru
          _
        %v755 = vld [vmem:[#allocation2] sm:$0xf]
        %v756 = vld [vmem:[%s707] sm:$0xf]
        %v757 = vld [vmem:[%s707 + $0x4] sm:$0xf]
        %v758 = vld [vmem:[%s707 + $0x8] sm:$0xf]
        %v759 = vld [vmem:[%s707 + $0xc] sm:$0xf]
        %v760 = vld [vmem:[%s710] sm:$0x1]
        %v762 = vlaneseq
        %v763 = vshrl.u32 %v762, 7
        %v764 = vsub.s32 0, %v763
        %v765 = vrot.slane %v760, %v764
        %v771 = vunpack.c.l.b16 %v756
        %v772 = vunpack.c.l.b16 %v757
        %v773 = vunpack.c.l.b16 %v758
        %v774 = vunpack.c.l.b16 %v759
        %v775 = vpack.c.b16 %v772, %v771
        %v776 = vpack.c.b16 %v774, %v773
        %vm779 = vcmask 261120
        %v781 = vsel %vm779, %v755, 0
        %783 = vmatprep.subr.bf16.mxu0 0
        %784 = vmatpush1.bf16.msra.mxu0 %v775
        %785 = vmatprep.subr.bf16.mxu0 0
        %786 = vmatpush1.bf16.msra.mxu0 %v776
        %787 = vmatprep.subr.bf16.mxu0 0
        %788 = vmatpush1.bf16.msra.mxu0 0
        %789 = vmatprep.subr.bf16.mxu0 0
        %790 = vmatpush1.bf16.msra.mxu0 0
        %791 = vmatprep.subr.bf16.mxu0 0
        %792 = vmatpush1.bf16.msra.mxu0 0
        %793 = vmatprep.subr.bf16.mxu0 0
        %794 = vmatpush1.bf16.msra.mxu0 0
        %795 = vmatprep.subr.bf16.mxu0 0
        %796 = vmatpush1.bf16.msra.mxu0 0
        %797 = vmatprep.subr.bf16.mxu0 0
        %798 = vmatpush1.bf16.msra.mxu0 0
        %799 = vmatprep.subr.bf16.mxu0 0
        %800 = vmatpush1.bf16.msra.mxu0 0
        %801 = vmatprep.subr.bf16.mxu0 0
        %802 = vmatpush1.bf16.msra.mxu0 0
        %803 = vmatprep.subr.bf16.mxu0 0
        %804 = vmatpush1.bf16.msra.mxu0 0
        %805 = vmatprep.subr.bf16.mxu0 0
        %806 = vmatpush1.bf16.msra.mxu0 0
        %807 = vmatprep.subr.bf16.mxu0 0
        %808 = vmatpush1.bf16.msra.mxu0 0
        %809 = vmatprep.subr.bf16.mxu0 0
        %810 = vmatpush1.bf16.msra.mxu0 0
        %811 = vmatprep.subr.bf16.mxu0 0
        %812 = vmatpush1.bf16.msra.mxu0 0
        %813 = vmatprep.subr.bf16.mxu0 0
        %814 = vmatpush1.bf16.msra.mxu0 0
        %815 = vmatprep.mubr.bf16.mxu0 0
        %816 = vmatmul.mubr.bf16.gmra.mrb[0].mxu0 %v781
        %v817 = vpop.f32.mrb[0].mxu0
        %v818 = vadd.f32 %v765, %v817
        %v819 = vpop.f32.mrb[0].mxu0
        %v820 = vpop.f32.mrb[0].mxu0
        %v821 = vpop.f32.mrb[0].mxu0
        %822 = vdwg.mxu0
        %824 = vrot.lane.b32.xlu0 %v818, 120
        %v825 = vpop.permute.xlu0 %824
        %827 = vrot.lane.b32.xlu0 %v818, 112
        %v828 = vpop.permute.xlu0 %827
        %830 = vrot.lane.b32.xlu0 %v818, 104
        %v831 = vpop.permute.xlu0 %830
        %v833 = vpack.c.bf16 %v818, %v818
        %v834 = vpack.c.bf16 %v825, %v825
        %v835 = vpack.c.bf16 %v828, %v828
        %v836 = vpack.c.bf16 %v831, %v831
        %838 = vrot.lane.b32.xlu0 %v833, 96
        %v839 = vpop.permute.xlu0 %838
        %vm840 = vcmask 64512
        %v842 = vsel %vm840, %v833, 0
        %v845 = vsel %vm840, %v839, 0
        %847 = vmatprep.subr.bf16.mxu0 0
        %848 = vmatpush1.bf16.xpose.msra.mxu0 %v845
        %849 = vmatprep.subr.bf16.mxu0 0
        %850 = vmatpush1.bf16.xpose.msra.mxu0 0
        %851 = vmatprep.subr.bf16.mxu0 0
        %852 = vmatpush1.bf16.xpose.msra.mxu0 0
        %853 = vmatprep.subr.bf16.mxu0 0
        %854 = vmatpush1.bf16.xpose.msra.mxu0 0
        %855 = vmatprep.subr.bf16.mxu0 0
        %856 = vmatpush1.bf16.xpose.msra.mxu0 0
        %857 = vmatprep.subr.bf16.mxu0 0
        %858 = vmatpush1.bf16.xpose.msra.mxu0 0
        %859 = vmatprep.subr.bf16.mxu0 0
        %860 = vmatpush1.bf16.xpose.msra.mxu0 0
        %861 = vmatprep.subr.bf16.mxu0 0
        %862 = vmatpush1.bf16.xpose.msra.mxu0 0
        %863 = vmatprep.subr.bf16.mxu0 0
        %864 = vmatpush1.bf16.xpose.msra.mxu0 0
        %865 = vmatprep.subr.bf16.mxu0 0
        %866 = vmatpush1.bf16.xpose.msra.mxu0 0
        %867 = vmatprep.subr.bf16.mxu0 0
        %868 = vmatpush1.bf16.xpose.msra.mxu0 0
        %869 = vmatprep.subr.bf16.mxu0 0
        %870 = vmatpush1.bf16.xpose.msra.mxu0 0
        %871 = vmatprep.subr.bf16.mxu0 0
        %872 = vmatpush1.bf16.xpose.msra.mxu0 0
        %873 = vmatprep.subr.bf16.mxu0 0
        %874 = vmatpush1.bf16.xpose.msra.mxu0 0
        %875 = vmatprep.subr.bf16.mxu0 0
        %876 = vmatpush1.bf16.xpose.msra.mxu0 0
        %877 = vmatprep.subr.bf16.mxu0 0
        %878 = vmatpush1.bf16.xpose.msra.mxu0 0
        %879 = vmatprep.mubr.bf16.mxu0 0
        %880 = vmatmul.mubr.bf16.gmra.mrb[0].mxu0 %v842
        %v881 = vpop.f32.mrb[0].mxu0
        %v882 = vadd.f32 0.0, %v881
        %v883 = vpop.f32.mrb[0].mxu0
        %v884 = vpop.f32.mrb[0].mxu0
        %v885 = vpop.f32.mrb[0].mxu0
        %886 = vdwg.mxu0
        %888 = vrot.lane.b32.xlu0 %v834, 96
        %v889 = vpop.permute.xlu0 %888
        %v891 = vsel %vm840, %v834, 0
        %v894 = vsel %vm840, %v889, 0
        %896 = vmatprep.subr.bf16.mxu0 0
        %897 = vmatpush1.bf16.xpose.msra.mxu0 %v894
        %898 = vmatprep.subr.bf16.mxu0 0
        %899 = vmatpush1.bf16.xpose.msra.mxu0 0
        %900 = vmatprep.subr.bf16.mxu0 0
        %901 = vmatpush1.bf16.xpose.msra.mxu0 0
        %902 = vmatprep.subr.bf16.mxu0 0
        %903 = vmatpush1.bf16.xpose.msra.mxu0 0
        %904 = vmatprep.subr.bf16.mxu0 0
        %905 = vmatpush1.bf16.xpose.msra.mxu0 0
        %906 = vmatprep.subr.bf16.mxu0 0
        %907 = vmatpush1.bf16.xpose.msra.mxu0 0
        %908 = vmatprep.subr.bf16.mxu0 0
        %909 = vmatpush1.bf16.xpose.msra.mxu0 0
        %910 = vmatprep.subr.bf16.mxu0 0
        %911 = vmatpush1.bf16.xpose.msra.mxu0 0
        %912 = vmatprep.subr.bf16.mxu0 0
        %913 = vmatpush1.bf16.xpose.msra.mxu0 0
        %914 = vmatprep.subr.bf16.mxu0 0
        %915 = vmatpush1.bf16.xpose.msra.mxu0 0
        %916 = vmatprep.subr.bf16.mxu0 0
        %917 = vmatpush1.bf16.xpose.msra.mxu0 0
        %918 = vmatprep.subr.bf16.mxu0 0
        %919 = vmatpush1.bf16.xpose.msra.mxu0 0
        %920 = vmatprep.subr.bf16.mxu0 0
        %921 = vmatpush1.bf16.xpose.msra.mxu0 0
        %922 = vmatprep.subr.bf16.mxu0 0
        %923 = vmatpush1.bf16.xpose.msra.mxu0 0
        %924 = vmatprep.subr.bf16.mxu0 0
        %925 = vmatpush1.bf16.xpose.msra.mxu0 0
        %926 = vmatprep.subr.bf16.mxu0 0
        %927 = vmatpush1.bf16.xpose.msra.mxu0 0
        %928 = vmatprep.mubr.bf16.mxu0 0
        %929 = vmatmul.mubr.bf16.gmra.mrb[0].mxu0 %v891
        %v930 = vpop.f32.mrb[0].mxu0
        %v931 = vadd.f32 0.0, %v930
        %v932 = vpop.f32.mrb[0].mxu0
        %v933 = vpop.f32.mrb[0].mxu0
        %v934 = vpop.f32.mrb[0].mxu0
        %935 = vdwg.mxu0
        %937 = vrot.lane.b32.xlu0 %v835, 96
        %v938 = vpop.permute.xlu0 %937
        %v940 = vsel %vm840, %v835, 0
        %v943 = vsel %vm840, %v938, 0
        %945 = vmatprep.subr.bf16.mxu0 0
        %946 = vmatpush1.bf16.xpose.msra.mxu0 %v943
        %947 = vmatprep.subr.bf16.mxu0 0
        %948 = vmatpush1.bf16.xpose.msra.mxu0 0
        %949 = vmatprep.subr.bf16.mxu0 0
        %950 = vmatpush1.bf16.xpose.msra.mxu0 0
        %951 = vmatprep.subr.bf16.mxu0 0
        %952 = vmatpush1.bf16.xpose.msra.mxu0 0
        %953 = vmatprep.subr.bf16.mxu0 0
        %954 = vmatpush1.bf16.xpose.msra.mxu0 0
        %955 = vmatprep.subr.bf16.mxu0 0
        %956 = vmatpush1.bf16.xpose.msra.mxu0 0
        %957 = vmatprep.subr.bf16.mxu0 0
        %958 = vmatpush1.bf16.xpose.msra.mxu0 0
        %959 = vmatprep.subr.bf16.mxu0 0
        %960 = vmatpush1.bf16.xpose.msra.mxu0 0
        %961 = vmatprep.subr.bf16.mxu0 0
        %962 = vmatpush1.bf16.xpose.msra.mxu0 0
        %963 = vmatprep.subr.bf16.mxu0 0
        %964 = vmatpush1.bf16.xpose.msra.mxu0 0
        %965 = vmatprep.subr.bf16.mxu0 0
        %966 = vmatpush1.bf16.xpose.msra.mxu0 0
        %967 = vmatprep.subr.bf16.mxu0 0
        %968 = vmatpush1.bf16.xpose.msra.mxu0 0
        %969 = vmatprep.subr.bf16.mxu0 0
        %970 = vmatpush1.bf16.xpose.msra.mxu0 0
        %971 = vmatprep.subr.bf16.mxu0 0
        %972 = vmatpush1.bf16.xpose.msra.mxu0 0
        %973 = vmatprep.subr.bf16.mxu0 0
        %974 = vmatpush1.bf16.xpose.msra.mxu0 0
        %975 = vmatprep.subr.bf16.mxu0 0
        %976 = vmatpush1.bf16.xpose.msra.mxu0 0
        %977 = vmatprep.mubr.bf16.mxu0 0
        %978 = vmatmul.mubr.bf16.gmra.mrb[0].mxu0 %v940
        %v979 = vpop.f32.mrb[0].mxu0
        %v980 = vadd.f32 0.0, %v979
        %v981 = vpop.f32.mrb[0].mxu0
        %v982 = vpop.f32.mrb[0].mxu0
        %v983 = vpop.f32.mrb[0].mxu0
        %984 = vdwg.mxu0
        %986 = vrot.lane.b32.xlu0 %v836, 96
        %v987 = vpop.permute.xlu0 %986
        %v989 = vsel %vm840, %v836, 0
        %v992 = vsel %vm840, %v987, 0
        %994 = vmatprep.subr.bf16.mxu0 0
        %995 = vmatpush1.bf16.xpose.msra.mxu0 %v992
        %996 = vmatprep.subr.bf16.mxu0 0
        %997 = vmatpush1.bf16.xpose.msra.mxu0 0
        %998 = vmatprep.subr.bf16.mxu0 0
        %999 = vmatpush1.bf16.xpose.msra.mxu0 0
        %1000 = vmatprep.subr.bf16.mxu0 0
        %1001 = vmatpush1.bf16.xpose.msra.mxu0 0
        %1002 = vmatprep.subr.bf16.mxu0 0
        %1003 = vmatpush1.bf16.xpose.msra.mxu0 0
        %1004 = vmatprep.subr.bf16.mxu0 0
        %1005 = vmatpush1.bf16.xpose.msra.mxu0 0
        %1006 = vmatprep.subr.bf16.mxu0 0
        %1007 = vmatpush1.bf16.xpose.msra.mxu0 0
        %1008 = vmatprep.subr.bf16.mxu0 0
        %1009 = vmatpush1.bf16.xpose.msra.mxu0 0
        %1010 = vmatprep.subr.bf16.mxu0 0
        %1011 = vmatpush1.bf16.xpose.msra.mxu0 0
        %1012 = vmatprep.subr.bf16.mxu0 0
        %1013 = vmatpush1.bf16.xpose.msra.mxu0 0
        %1014 = vmatprep.subr.bf16.mxu0 0
        %1015 = vmatpush1.bf16.xpose.msra.mxu0 0
        %1016 = vmatprep.subr.bf16.mxu0 0
        %1017 = vmatpush1.bf16.xpose.msra.mxu0 0
        %1018 = vmatprep.subr.bf16.mxu0 0
        %1019 = vmatpush1.bf16.xpose.msra.mxu0 0
        %1020 = vmatprep.subr.bf16.mxu0 0
        %1021 = vmatpush1.bf16.xpose.msra.mxu0 0
        %1022 = vmatprep.subr.bf16.mxu0 0
        %1023 = vmatpush1.bf16.xpose.msra.mxu0 0
        %1024 = vmatprep.subr.bf16.mxu0 0
        %1025 = vmatpush1.bf16.xpose.msra.mxu0 0
        %1026 = vmatprep.mubr.bf16.mxu0 0
        %1027 = vmatmul.mubr.bf16.gmra.mrb[0].mxu0 %v989
        %v1028 = vpop.f32.mrb[0].mxu0
        %v1029 = vadd.f32 0.0, %v1028
        %v1030 = vpop.f32.mrb[0].mxu0
        %v1031 = vpop.f32.mrb[0].mxu0
        %v1032 = vpop.f32.mrb[0].mxu0
        %1033 = vdwg.mxu0
        %v1034 = vmul.f32 %v882, 0.35355338
        %v1035 = vmul.f32 %v931, 0.35355338
        %v1036 = vmul.f32 %v980, 0.35355338
        %v1037 = vmul.f32 %v1029, 0.35355338
        %v1038 = vsel %vm840, %v1034, -inf
        %1039 = vmax.xlane.f32.xlu0 %v1038
        %v1040 = vpop.xlane.xlu0 %1039
        %v1041 = vsel %vm840, %v1035, -inf
        %1042 = vmax.xlane.f32.xlu0 %v1041
        %v1043 = vpop.xlane.xlu0 %1042
        %v1044 = vsel %vm840, %v1036, -inf
        %1045 = vmax.xlane.f32.xlu0 %v1044
        %v1046 = vpop.xlane.xlu0 %1045
        %v1047 = vsel %vm840, %v1037, -inf
        %1048 = vmax.xlane.f32.xlu0 %v1047
        %v1049 = vpop.xlane.xlu0 %1048
        %v1050 = vsub.f32 %v1034, %v1040
        %v1051 = vsub.f32 %v1035, %v1043
        %v1052 = vsub.f32 %v1036, %v1046
        %v1053 = vsub.f32 %v1037, %v1049
        %v1054 = vmul.f32 %v1050, 1.442695
        %v1055 = vpow.pop %v1054
        %v1056 = vmul.f32 %v1051, 1.442695
        %v1057 = vpow.pop %v1056
        %v1058 = vmul.f32 %v1052, 1.442695
        %v1059 = vpow.pop %v1058
        %v1060 = vmul.f32 %v1053, 1.442695
        %v1061 = vpow.pop %v1060
        %v1062 = vsel %vm840, %v1055, 0.0
        %1063 = vadd.xlane.f32.xlu0 %v1062
        %v1064 = vpop.xlane.xlu0 %1063
        %v1065 = vsel %vm840, %v1057, 0.0
        %1066 = vadd.xlane.f32.xlu0 %v1065
        %v1067 = vpop.xlane.xlu0 %1066
        %v1068 = vsel %vm840, %v1059, 0.0
        %1069 = vadd.xlane.f32.xlu0 %v1068
        %v1070 = vpop.xlane.xlu0 %1069
        %v1071 = vsel %vm840, %v1061, 0.0
        %1072 = vadd.xlane.f32.xlu0 %v1071
        %v1073 = vpop.xlane.xlu0 %1072
        %v1074 = vrcp.pop %v1064
        %v1075 = vrcp.pop %v1067
        %v1076 = vrcp.pop %v1070
        %v1077 = vrcp.pop %v1073
        %v1078 = vmul.f32 %v1055, %v1074
        %v1079 = vmul.f32 %v1057, %v1075
        %v1080 = vmul.f32 %v1059, %v1076
        %v1081 = vmul.f32 %v1061, %v1077
        %v1082 = vpack.c.bf16 %v1078, %v1078
        %v1083 = vpack.c.bf16 %v1079, %v1079
        %v1084 = vpack.c.bf16 %v1080, %v1080
        %v1085 = vpack.c.bf16 %v1081, %v1081
        %1086 = vrot.lane.b32.xlu0 %v833, 64
        %v1087 = vpop.permute.xlu0 %1086
        %v1089 = vsel %vm840, %v1082, 0
        %vm1091 = vcmask 1043456
        %v1093 = vsel %vm1091, %v1087, 0
        %1095 = vmatprep.subr.bf16.mxu0 0
        %1096 = vmatpush1.bf16.msra.mxu0 %v1093
        %1097 = vmatprep.subr.bf16.mxu0 0
        %1098 = vmatpush1.bf16.msra.mxu0 0
        %1099 = vmatprep.subr.bf16.mxu0 0
        %1100 = vmatpush1.bf16.msra.mxu0 0
        %1101 = vmatprep.subr.bf16.mxu0 0
        %1102 = vmatpush1.bf16.msra.mxu0 0
        %1103 = vmatprep.subr.bf16.mxu0 0
        %1104 = vmatpush1.bf16.msra.mxu0 0
        %1105 = vmatprep.subr.bf16.mxu0 0
        %1106 = vmatpush1.bf16.msra.mxu0 0
        %1107 = vmatprep.subr.bf16.mxu0 0
        %1108 = vmatpush1.bf16.msra.mxu0 0
        %1109 = vmatprep.subr.bf16.mxu0 0
        %1110 = vmatpush1.bf16.msra.mxu0 0
        %1111 = vmatprep.subr.bf16.mxu0 0
        %1112 = vmatpush1.bf16.msra.mxu0 0
        %1113 = vmatprep.subr.bf16.mxu0 0
        %1114 = vmatpush1.bf16.msra.mxu0 0
        %1115 = vmatprep.subr.bf16.mxu0 0
        %1116 = vmatpush1.bf16.msra.mxu0 0
        %1117 = vmatprep.subr.bf16.mxu0 0
        %1118 = vmatpush1.bf16.msra.mxu0 0
        %1119 = vmatprep.subr.bf16.mxu0 0
        %1120 = vmatpush1.bf16.msra.mxu0 0
        %1121 = vmatprep.subr.bf16.mxu0 0
        %1122 = vmatpush1.bf16.msra.mxu0 0
        %1123 = vmatprep.subr.bf16.mxu0 0
        %1124 = vmatpush1.bf16.msra.mxu0 0
        %1125 = vmatprep.subr.bf16.mxu0 0
        %1126 = vmatpush1.bf16.msra.mxu0 0
        %1127 = vmatprep.mubr.bf16.mxu0 0
        %1128 = vmatmul.mubr.bf16.gmra.mrb[0].mxu0 %v1089
        %v1129 = vpop.f32.mrb[0].mxu0
        %v1130 = vadd.f32 0.0, %v1129
        %v1131 = vpop.f32.mrb[0].mxu0
        %v1132 = vpop.f32.mrb[0].mxu0
        %v1133 = vpop.f32.mrb[0].mxu0
        %1134 = vdwg.mxu0
        %1135 = vrot.lane.b32.xlu0 %v834, 64
        %v1136 = vpop.permute.xlu0 %1135
        %v1138 = vsel %vm840, %v1083, 0
        %v1141 = vsel %vm1091, %v1136, 0
        %1143 = vmatprep.subr.bf16.mxu0 0
        %1144 = vmatpush1.bf16.msra.mxu0 %v1141
        %1145 = vmatprep.subr.bf16.mxu0 0
        %1146 = vmatpush1.bf16.msra.mxu0 0
        %1147 = vmatprep.subr.bf16.mxu0 0
        %1148 = vmatpush1.bf16.msra.mxu0 0
        %1149 = vmatprep.subr.bf16.mxu0 0
        %1150 = vmatpush1.bf16.msra.mxu0 0
        %1151 = vmatprep.subr.bf16.mxu0 0
        %1152 = vmatpush1.bf16.msra.mxu0 0
        %1153 = vmatprep.subr.bf16.mxu0 0
        %1154 = vmatpush1.bf16.msra.mxu0 0
        %1155 = vmatprep.subr.bf16.mxu0 0
        %1156 = vmatpush1.bf16.msra.mxu0 0
        %1157 = vmatprep.subr.bf16.mxu0 0
        %1158 = vmatpush1.bf16.msra.mxu0 0
        %1159 = vmatprep.subr.bf16.mxu0 0
        %1160 = vmatpush1.bf16.msra.mxu0 0
        %1161 = vmatprep.subr.bf16.mxu0 0
        %1162 = vmatpush1.bf16.msra.mxu0 0
        %1163 = vmatprep.subr.bf16.mxu0 0
        %1164 = vmatpush1.bf16.msra.mxu0 0
        %1165 = vmatprep.subr.bf16.mxu0 0
        %1166 = vmatpush1.bf16.msra.mxu0 0
        %1167 = vmatprep.subr.bf16.mxu0 0
        %1168 = vmatpush1.bf16.msra.mxu0 0
        %1169 = vmatprep.subr.bf16.mxu0 0
        %1170 = vmatpush1.bf16.msra.mxu0 0
        %1171 = vmatprep.subr.bf16.mxu0 0
        %1172 = vmatpush1.bf16.msra.mxu0 0
        %1173 = vmatprep.subr.bf16.mxu0 0
        %1174 = vmatpush1.bf16.msra.mxu0 0
        %1175 = vmatprep.mubr.bf16.mxu0 0
        %1176 = vmatmul.mubr.bf16.gmra.mrb[0].mxu0 %v1138
        %v1177 = vpop.f32.mrb[0].mxu0
        %v1178 = vadd.f32 0.0, %v1177
        %v1179 = vpop.f32.mrb[0].mxu0
        %v1180 = vpop.f32.mrb[0].mxu0
        %v1181 = vpop.f32.mrb[0].mxu0
        %1182 = vdwg.mxu0
        %1183 = vrot.lane.b32.xlu0 %v835, 64
        %v1184 = vpop.permute.xlu0 %1183
        %v1186 = vsel %vm840, %v1084, 0
        %v1189 = vsel %vm1091, %v1184, 0
        %1191 = vmatprep.subr.bf16.mxu0 0
        %1192 = vmatpush1.bf16.msra.mxu0 %v1189
        %1193 = vmatprep.subr.bf16.mxu0 0
        %1194 = vmatpush1.bf16.msra.mxu0 0
        %1195 = vmatprep.subr.bf16.mxu0 0
        %1196 = vmatpush1.bf16.msra.mxu0 0
        %1197 = vmatprep.subr.bf16.mxu0 0
        %1198 = vmatpush1.bf16.msra.mxu0 0
        %1199 = vmatprep.subr.bf16.mxu0 0
        %1200 = vmatpush1.bf16.msra.mxu0 0
        %1201 = vmatprep.subr.bf16.mxu0 0
        %1202 = vmatpush1.bf16.msra.mxu0 0
        %1203 = vmatprep.subr.bf16.mxu0 0
        %1204 = vmatpush1.bf16.msra.mxu0 0
        %1205 = vmatprep.subr.bf16.mxu0 0
        %1206 = vmatpush1.bf16.msra.mxu0 0
        %1207 = vmatprep.subr.bf16.mxu0 0
        %1208 = vmatpush1.bf16.msra.mxu0 0
        %1209 = vmatprep.subr.bf16.mxu0 0
        %1210 = vmatpush1.bf16.msra.mxu0 0
        %1211 = vmatprep.subr.bf16.mxu0 0
        %1212 = vmatpush1.bf16.msra.mxu0 0
        %1213 = vmatprep.subr.bf16.mxu0 0
        %1214 = vmatpush1.bf16.msra.mxu0 0
        %1215 = vmatprep.subr.bf16.mxu0 0
        %1216 = vmatpush1.bf16.msra.mxu0 0
        %1217 = vmatprep.subr.bf16.mxu0 0
        %1218 = vmatpush1.bf16.msra.mxu0 0
        %1219 = vmatprep.subr.bf16.mxu0 0
        %1220 = vmatpush1.bf16.msra.mxu0 0
        %1221 = vmatprep.subr.bf16.mxu0 0
        %1222 = vmatpush1.bf16.msra.mxu0 0
        %1223 = vmatprep.mubr.bf16.mxu0 0
        %1224 = vmatmul.mubr.bf16.gmra.mrb[0].mxu0 %v1186
        %v1225 = vpop.f32.mrb[0].mxu0
        %v1226 = vadd.f32 0.0, %v1225
        %v1227 = vpop.f32.mrb[0].mxu0
        %v1228 = vpop.f32.mrb[0].mxu0
        %v1229 = vpop.f32.mrb[0].mxu0
        %1230 = vdwg.mxu0
        %1231 = vrot.lane.b32.xlu0 %v836, 64
        %v1232 = vpop.permute.xlu0 %1231
        %v1234 = vsel %vm840, %v1085, 0
        %v1237 = vsel %vm1091, %v1232, 0
        %1239 = vmatprep.subr.bf16.mxu0 0
        %1240 = vmatpush1.bf16.msra.mxu0 %v1237
        %1241 = vmatprep.subr.bf16.mxu0 0
        %1242 = vmatpush1.bf16.msra.mxu0 0
        %1243 = vmatprep.subr.bf16.mxu0 0
        %1244 = vmatpush1.bf16.msra.mxu0 0
        %1245 = vmatprep.subr.bf16.mxu0 0
        %1246 = vmatpush1.bf16.msra.mxu0 0
        %1247 = vmatprep.subr.bf16.mxu0 0
        %1248 = vmatpush1.bf16.msra.mxu0 0
        %1249 = vmatprep.subr.bf16.mxu0 0
        %1250 = vmatpush1.bf16.msra.mxu0 0
        %1251 = vmatprep.subr.bf16.mxu0 0
        %1252 = vmatpush1.bf16.msra.mxu0 0
        %1253 = vmatprep.subr.bf16.mxu0 0
        %1254 = vmatpush1.bf16.msra.mxu0 0
        %1255 = vmatprep.subr.bf16.mxu0 0
        %1256 = vmatpush1.bf16.msra.mxu0 0
        %1257 = vmatprep.subr.bf16.mxu0 0
        %1258 = vmatpush1.bf16.msra.mxu0 0
        %1259 = vmatprep.subr.bf16.mxu0 0
        %1260 = vmatpush1.bf16.msra.mxu0 0
        %1261 = vmatprep.subr.bf16.mxu0 0
        %1262 = vmatpush1.bf16.msra.mxu0 0
        %1263 = vmatprep.subr.bf16.mxu0 0
        %1264 = vmatpush1.bf16.msra.mxu0 0
        %1265 = vmatprep.subr.bf16.mxu0 0
        %1266 = vmatpush1.bf16.msra.mxu0 0
        %1267 = vmatprep.subr.bf16.mxu0 0
        %1268 = vmatpush1.bf16.msra.mxu0 0
        %1269 = vmatprep.subr.bf16.mxu0 0
        %1270 = vmatpush1.bf16.msra.mxu0 0
        %1271 = vmatprep.mubr.bf16.mxu0 0
        %1272 = vmatmul.mubr.bf16.gmra.mrb[0].mxu0 %v1234
        %v1273 = vpop.f32.mrb[0].mxu0
        %v1274 = vadd.f32 0.0, %v1273
        %v1275 = vpop.f32.mrb[0].mxu0
        %v1276 = vpop.f32.mrb[0].mxu0
        %v1277 = vpop.f32.mrb[0].mxu0
        %1278 = vdwg.mxu0
        %1280 = vrot.lane.b32.xlu0 %v1178, 8
        %v1281 = vpop.permute.xlu0 %1280
        %1284 = vrot.lane.b32.xlu0 %v1226, 16
        %v1285 = vpop.permute.xlu0 %1284
        %1288 = vrot.lane.b32.xlu0 %v1274, 24
        %v1289 = vpop.permute.xlu0 %1288
        %v1291 = vsel %vm840, %v1130, %v1281
        %vm1292 = vcmask 130048
        %v1293 = vsel %vm1292, %v1291, %v1285
        %vm1294 = vcmask 195584
        %v1295 = vsel %vm1294, %v1293, %v1289
        %v1296 = vpack.c.bf16 %v1295, %v1295
        %v1297 = vld [vmem:[%s715] sm:$0xf]
        %v1298 = vld [vmem:[%s715 + $0x4] sm:$0xf]
        %v1299 = vld [vmem:[%s715 + $0x8] sm:$0xf]
        %v1300 = vld [vmem:[%s715 + $0xc] sm:$0xf]
        %v1301 = vld [vmem:[%s718] sm:$0x1]
        %v1303 = vlaneseq
        %v1304 = vshrl.u32 %v1303, 7
        %v1305 = vsub.s32 0, %v1304
        %v1306 = vrot.slane %v1301, %v1305
        %v1312 = vunpack.c.l.b16 %v1297
        %v1313 = vunpack.c.l.b16 %v1298
        %v1314 = vunpack.c.l.b16 %v1299
        %v1315 = vunpack.c.l.b16 %v1300
        %v1316 = vpack.c.b16 %v1313, %v1312
        %v1317 = vpack.c.b16 %v1315, %v1314
        %v1321 = vsel %vm779, %v1296, 0
        %1323 = vmatprep.subr.bf16.mxu0 0
        %1324 = vmatpush1.bf16.msra.mxu0 %v1316
        %1325 = vmatprep.subr.bf16.mxu0 0
        %1326 = vmatpush1.bf16.msra.mxu0 %v1317
        %1327 = vmatprep.subr.bf16.mxu0 0
        %1328 = vmatpush1.bf16.msra.mxu0 0
        %1329 = vmatprep.subr.bf16.mxu0 0
        %1330 = vmatpush1.bf16.msra.mxu0 0
        %1331 = vmatprep.subr.bf16.mxu0 0
        %1332 = vmatpush1.bf16.msra.mxu0 0
        %1333 = vmatprep.subr.bf16.mxu0 0
        %1334 = vmatpush1.bf16.msra.mxu0 0
        %1335 = vmatprep.subr.bf16.mxu0 0
        %1336 = vmatpush1.bf16.msra.mxu0 0
        %1337 = vmatprep.subr.bf16.mxu0 0
        %1338 = vmatpush1.bf16.msra.mxu0 0
        %1339 = vmatprep.subr.bf16.mxu0 0
        %1340 = vmatpush1.bf16.msra.mxu0 0
        %1341 = vmatprep.subr.bf16.mxu0 0
        %1342 = vmatpush1.bf16.msra.mxu0 0
        %1343 = vmatprep.subr.bf16.mxu0 0
        %1344 = vmatpush1.bf16.msra.mxu0 0
        %1345 = vmatprep.subr.bf16.mxu0 0
        %1346 = vmatpush1.bf16.msra.mxu0 0
        %1347 = vmatprep.subr.bf16.mxu0 0
        %1348 = vmatpush1.bf16.msra.mxu0 0
        %1349 = vmatprep.subr.bf16.mxu0 0
        %1350 = vmatpush1.bf16.msra.mxu0 0
        %1351 = vmatprep.subr.bf16.mxu0 0
        %1352 = vmatpush1.bf16.msra.mxu0 0
        %1353 = vmatprep.subr.bf16.mxu0 0
        %1354 = vmatpush1.bf16.msra.mxu0 0
        %1355 = vmatprep.mubr.bf16.mxu0 0
        %1356 = vmatmul.mubr.bf16.gmra.mrb[0].mxu0 %v1321
        %v1357 = vpop.f32.mrb[0].mxu0
        %v1358 = vadd.f32 %v1306, %v1357
        %v1359 = vpop.f32.mrb[0].mxu0
        %v1360 = vpop.f32.mrb[0].mxu0
        %v1361 = vpop.f32.mrb[0].mxu0
        %1362 = vdwg.mxu0
        %v1363 = vunpack.c.l.bf16 %v755
        %v1364 = vadd.f32 %v1363, %v1358
        %v1365 = vld [vmem:[%s721] sm:$0x1]
        %v1366 = vld [vmem:[%s724] sm:$0x1]
        %v1367 = vsel %vm779, %v1364, 0.0
        %1368 = vadd.xlane.f32.xlu0 %v1367
        %v1369 = vpop.xlane.xlu0 %1368
        %v1370 = vrcp.pop 32.0
        %v1371 = vmul.f32 %v1369, %v1370
        %v1372 = vsub.f32 %v1364, %v1371
        %v1373 = vmul.f32 %v1372, %v1372
        %v1374 = vsel %vm779, %v1373, 0.0
        %1375 = vadd.xlane.f32.xlu0 %v1374
        %v1376 = vpop.xlane.xlu0 %1375
        %v1377 = vmul.f32 %v1376, %v1370
        %v1378 = vadd.f32 %v1377, 1e-05
        %v1379 = vrsqrt.pop %v1378
        %v1380 = vmul.f32 %v1372, %v1379
        %v1382 = vlaneseq
        %v1383 = vshrl.u32 %v1382, 7
        %v1384 = vsub.s32 0, %v1383
        %v1385 = vrot.slane %v1365, %v1384
        %v1387 = vmul.f32 %v1380, %v1385
        %v1389 = vlaneseq
        %v1390 = vshrl.u32 %v1389, 7
        %v1391 = vsub.s32 0, %v1390
        %v1392 = vrot.slane %v1366, %v1391
        %v1394 = vadd.f32 %v1387, %v1392
        %v1395 = vpack.c.bf16 %v1394, %v1394
        %v1396 = vld [vmem:[%s729] sm:$0xf]
        %v1397 = vld [vmem:[%s729 + $0x4] sm:$0xf]
        %v1398 = vld [vmem:[%s729 + $0x8] sm:$0xf]
        %v1399 = vld [vmem:[%s729 + $0xc] sm:$0xf]
        %v1400 = vld [vmem:[%s732] sm:$0x1]
        %v1402 = vlaneseq
        %v1403 = vshrl.u32 %v1402, 7
        %v1404 = vsub.s32 0, %v1403
        %v1405 = vrot.slane %v1400, %v1404
        %v1411 = vunpack.c.l.b16 %v1396
        %v1412 = vunpack.c.l.b16 %v1397
        %v1413 = vunpack.c.l.b16 %v1398
        %v1414 = vunpack.c.l.b16 %v1399
        %v1415 = vpack.c.b16 %v1412, %v1411
        %v1416 = vpack.c.b16 %v1414, %v1413
        %v1420 = vsel %vm779, %v1395, 0
        %1422 = vmatprep.subr.bf16.mxu0 0
        %1423 = vmatpush1.bf16.msra.mxu0 %v1415
        %1424 = vmatprep.subr.bf16.mxu0 0
        %1425 = vmatpush1.bf16.msra.mxu0 %v1416
        %1426 = vmatprep.subr.bf16.mxu0 0
        %1427 = vmatpush1.bf16.msra.mxu0 0
        %1428 = vmatprep.subr.bf16.mxu0 0
        %1429 = vmatpush1.bf16.msra.mxu0 0
        %1430 = vmatprep.subr.bf16.mxu0 0
        %1431 = vmatpush1.bf16.msra.mxu0 0
        %1432 = vmatprep.subr.bf16.mxu0 0
        %1433 = vmatpush1.bf16.msra.mxu0 0
        %1434 = vmatprep.subr.bf16.mxu0 0
        %1435 = vmatpush1.bf16.msra.mxu0 0
        %1436 = vmatprep.subr.bf16.mxu0 0
        %1437 = vmatpush1.bf16.msra.mxu0 0
        %1438 = vmatprep.subr.bf16.mxu0 0
        %1439 = vmatpush1.bf16.msra.mxu0 0
        %1440 = vmatprep.subr.bf16.mxu0 0
        %1441 = vmatpush1.bf16.msra.mxu0 0
        %1442 = vmatprep.subr.bf16.mxu0 0
        %1443 = vmatpush1.bf16.msra.mxu0 0
        %1444 = vmatprep.subr.bf16.mxu0 0
        %1445 = vmatpush1.bf16.msra.mxu0 0
        %1446 = vmatprep.subr.bf16.mxu0 0
        %1447 = vmatpush1.bf16.msra.mxu0 0
        %1448 = vmatprep.subr.bf16.mxu0 0
        %1449 = vmatpush1.bf16.msra.mxu0 0
        %1450 = vmatprep.subr.bf16.mxu0 0
        %1451 = vmatpush1.bf16.msra.mxu0 0
        %1452 = vmatprep.subr.bf16.mxu0 0
        %1453 = vmatpush1.bf16.msra.mxu0 0
        %1454 = vmatprep.mubr.bf16.mxu0 0
        %1455 = vmatmul.mubr.bf16.gmra.mrb[0].mxu0 %v1420
        %v1456 = vpop.f32.mrb[0].mxu0
        %v1457 = vadd.f32 %v1405, %v1456
        %v1458 = vpop.f32.mrb[0].mxu0
        %v1459 = vpop.f32.mrb[0].mxu0
        %v1460 = vpop.f32.mrb[0].mxu0
        %1461 = vdwg.mxu0
        %v1462 = vmul.f32 %v1457, 0.5
        %v1463 = vmul.f32 %v1457, 0.044715
        %v1464 = vmul.f32 %v1463, %v1457
        %v1465 = vmul.f32 %v1464, %v1457
        %v1466 = vadd.f32 %v1457, %v1465
        %v1467 = vmul.f32 %v1466, 0.7978846
        %v1468 = vtanh.pop %v1467
        %v1469 = vadd.f32 %v1468, 1.0
        %v1470 = vmul.f32 %v1462, %v1469
        %v1471 = vpack.c.bf16 %v1470, %v1470
        %v1472 = vld [vmem:[%s737] sm:$0xf]
        %v1473 = vld [vmem:[%s737 + $0x4] sm:$0xf]
        %v1474 = vld [vmem:[%s737 + $0x8] sm:$0xf]
        %v1475 = vld [vmem:[%s737 + $0xc] sm:$0xf]
        %v1476 = vld [vmem:[%s737 + $0x10] sm:$0xf]
        %v1477 = vld [vmem:[%s737 + $0x14] sm:$0xf]
        %v1478 = vld [vmem:[%s737 + $0x18] sm:$0xf]
        %v1479 = vld [vmem:[%s737 + $0x1c] sm:$0xf]
        %v1480 = vld [vmem:[%s737 + $0x20] sm:$0xf]
        %v1481 = vld [vmem:[%s737 + $0x24] sm:$0xf]
        %v1482 = vld [vmem:[%s737 + $0x28] sm:$0xf]
        %v1483 = vld [vmem:[%s737 + $0x2c] sm:$0xf]
        %v1484 = vld [vmem:[%s737 + $0x30] sm:$0xf]
        %v1485 = vld [vmem:[%s737 + $0x34] sm:$0xf]
        %v1486 = vld [vmem:[%s737 + $0x38] sm:$0xf]
        %v1487 = vld [vmem:[%s737 + $0x3c] sm:$0xf]
        %v1488 = vld [vmem:[%s740] sm:$0x1]
        %v1490 = vlaneseq
        %v1491 = vshrl.u32 %v1490, 7
        %v1492 = vsub.s32 0, %v1491
        %v1493 = vrot.slane %v1488, %v1492
        %v1511 = vunpack.c.l.b16 %v1472
        %v1512 = vunpack.c.l.b16 %v1473
        %v1513 = vunpack.c.l.b16 %v1474
        %v1514 = vunpack.c.l.b16 %v1475
        %v1515 = vunpack.c.l.b16 %v1476
        %v1516 = vunpack.c.l.b16 %v1477
        %v1517 = vunpack.c.l.b16 %v1478
        %v1518 = vunpack.c.l.b16 %v1479
        %v1519 = vunpack.c.l.b16 %v1480
        %v1520 = vunpack.c.l.b16 %v1481
        %v1521 = vunpack.c.l.b16 %v1482
        %v1522 = vunpack.c.l.b16 %v1483
        %v1523 = vunpack.c.l.b16 %v1484
        %v1524 = vunpack.c.l.b16 %v1485
        %v1525 = vunpack.c.l.b16 %v1486
        %v1526 = vunpack.c.l.b16 %v1487
        %v1527 = vpack.c.b16 %v1512, %v1511
        %v1528 = vpack.c.b16 %v1514, %v1513
        %v1529 = vpack.c.b16 %v1516, %v1515
        %v1530 = vpack.c.b16 %v1518, %v1517
        %v1531 = vpack.c.b16 %v1520, %v1519
        %v1532 = vpack.c.b16 %v1522, %v1521
        %v1533 = vpack.c.b16 %v1524, %v1523
        %v1534 = vpack.c.b16 %v1526, %v1525
        %1543 = vmatprep.subr.bf16.mxu0 0
        %1544 = vmatpush1.bf16.msra.mxu0 %v1527
        %1545 = vmatprep.subr.bf16.mxu0 0
        %1546 = vmatpush1.bf16.msra.mxu0 %v1528
        %1547 = vmatprep.subr.bf16.mxu0 0
        %1548 = vmatpush1.bf16.msra.mxu0 %v1529
        %1549 = vmatprep.subr.bf16.mxu0 0
        %1550 = vmatpush1.bf16.msra.mxu0 %v1530
        %1551 = vmatprep.subr.bf16.mxu0 0
        %1552 = vmatpush1.bf16.msra.mxu0 %v1531
        %1553 = vmatprep.subr.bf16.mxu0 0
        %1554 = vmatpush1.bf16.msra.mxu0 %v1532
        %1555 = vmatprep.subr.bf16.mxu0 0
        %1556 = vmatpush1.bf16.msra.mxu0 %v1533
        %1557 = vmatprep.subr.bf16.mxu0 0
        %1558 = vmatpush1.bf16.msra.mxu0 %v1534
        %1559 = vmatprep.subr.bf16.mxu0 0
        %1560 = vmatpush1.bf16.msra.mxu0 0
        %1561 = vmatprep.subr.bf16.mxu0 0
        %1562 = vmatpush1.bf16.msra.mxu0 0
        %1563 = vmatprep.subr.bf16.mxu0 0
        %1564 = vmatpush1.bf16.msra.mxu0 0
        %1565 = vmatprep.subr.bf16.mxu0 0
        %1566 = vmatpush1.bf16.msra.mxu0 0
        %1567 = vmatprep.subr.bf16.mxu0 0
        %1568 = vmatpush1.bf16.msra.mxu0 0
        %1569 = vmatprep.subr.bf16.mxu0 0
        %1570 = vmatpush1.bf16.msra.mxu0 0
        %1571 = vmatprep.subr.bf16.mxu0 0
        %1572 = vmatpush1.bf16.msra.mxu0 0
        %1573 = vmatprep.subr.bf16.mxu0 0
        %1574 = vmatpush1.bf16.msra.mxu0 0
        %1575 = vmatprep.mubr.bf16.mxu0 0
        %1576 = vmatmul.mubr.bf16.gmra.mrb[0].mxu0 %v1471
        %v1577 = vpop.f32.mrb[0].mxu0
        %v1578 = vadd.f32 %v1493, %v1577
        %v1579 = vpop.f32.mrb[0].mxu0
        %v1580 = vpop.f32.mrb[0].mxu0
        %v1581 = vpop.f32.mrb[0].mxu0
        %1582 = vdwg.mxu0
        %v1583 = vadd.f32 %v1394, %v1578
        %v1584 = vld [vmem:[%s743] sm:$0x1]
        %v1585 = vld [vmem:[%s746] sm:$0x1]
        %v1586 = vsel %vm779, %v1583, 0.0
        %1587 = vadd.xlane.f32.xlu0 %v1586
        %v1588 = vpop.xlane.xlu0 %1587
        %v1589 = vmul.f32 %v1588, %v1370
        %v1590 = vsub.f32 %v1583, %v1589
        %v1591 = vmul.f32 %v1590, %v1590
        %v1592 = vsel %vm779, %v1591, 0.0
        %1593 = vadd.xlane.f32.xlu0 %v1592
        %v1594 = vpop.xlane.xlu0 %1593
        %v1595 = vmul.f32 %v1594, %v1370
        %v1596 = vadd.f32 %v1595, 1e-05
        %v1597 = vrsqrt.pop %v1596
        %v1598 = vmul.f32 %v1590, %v1597
        %v1600 = vlaneseq
        %v1601 = vshrl.u32 %v1600, 7
        %v1602 = vsub.s32 0, %v1601
        %v1603 = vrot.slane %v1584, %v1602
        %v1605 = vmul.f32 %v1598, %v1603
        %v1607 = vlaneseq
        %v1608 = vshrl.u32 %v1607, 7
        %v1609 = vsub.s32 0, %v1608
        %v1610 = vrot.slane %v1585, %v1609
        %v1612 = vadd.f32 %v1605, %v1610
        %v1613 = vpack.c.bf16 %v1612, %v1612
        %vm1614 = vcmask 257024
        %1615 = vst.msk [vmem:[#allocation2] sm:$0xf] %vm1614, %v1613
        %p1616 = scmp.eq.s32.totalorder %s36, 1
        // Predicated region
        $region93: #{encoder_forward.1} parent=87 // pred_check
          %p1617 = pneg %p1616
        $region94: #{encoder_forward.1} parent=87 // pred_check_branch
          %1619 = sbr.rel (%p1617) target = $region96
        $region95: #{encoder_forward.1} parent=87 // pred_region
          %v1620 = vld [vmem:[%s13] sm:$0x1]
          %v1621 = vld [vmem:[%s14] sm:$0x1]
          %vm1622 = vcmask 253952
          %v1623 = vsel %vm1622, %v1612, 0.0
          %1624 = vadd.xlane.f32.xlu0 %v1623
          %v1625 = vpop.xlane.xlu0 %1624
          %v1626 = vmul.f32 %v1625, %v1370
          %v1627 = vsub.f32 %v1612, %v1626
          %v1628 = vmul.f32 %v1627, %v1627
          %v1629 = vsel %vm1622, %v1628, 0.0
          %1630 = vadd.xlane.f32.xlu0 %v1629
          %v1631 = vpop.xlane.xlu0 %1630
          %v1632 = vmul.f32 %v1631, %v1370
          %v1633 = vadd.f32 %v1632, 1e-05
          %v1634 = vrsqrt.pop %v1633
          %v1635 = vmul.f32 %v1627, %v1634
          %v1636 = vmul.f32 %v1635, %v1620
          %v1637 = vadd.f32 %v1636, %v1621
          %v1638 = vld [vmem:[%s15] sm:$0xff]
          %v1639 = vld [vmem:[%s15 + $0x8] sm:$0xff]
          %v1640 = vld [vmem:[%s15 + $0x10] sm:$0xff]
          %v1641 = vld [vmem:[%s15 + $0x18] sm:$0xff]
          %v1642 = vld [vmem:[%s16] sm:$0x1]
          %v1644 = vsel %vm779, %v1637, 0
          %1646 = vmatprep.subr.mxu0 0.0
          %1647 = vmatpush1.msra.mxu0 %v1638
          %1648 = vmatprep.subr.mxu0 0.0
          %1649 = vmatpush1.msra.mxu0 %v1639
          %1650 = vmatprep.subr.mxu0 0.0
          %1651 = vmatpush1.msra.mxu0 %v1640
          %1652 = vmatprep.subr.mxu0 0.0
          %1653 = vmatpush1.msra.mxu0 %v1641
          %1654 = vmatprep.subr.mxu0 0.0
          %1655 = vmatpush1.msra.mxu0 0.0
          %1656 = vmatprep.subr.mxu0 0.0
          %1657 = vmatpush1.msra.mxu0 0.0
          %1658 = vmatprep.subr.mxu0 0.0
          %1659 = vmatpush1.msra.mxu0 0.0
          %1660 = vmatprep.subr.mxu0 0.0
          %1661 = vmatpush1.msra.mxu0 0.0
          %1662 = vmatprep.subr.mxu0 0.0
          %1663 = vmatpush1.msra.mxu0 0.0
          %1664 = vmatprep.subr.mxu0 0.0
          %1665 = vmatpush1.msra.mxu0 0.0
          %1666 = vmatprep.subr.mxu0 0.0
          %1667 = vmatpush1.msra.mxu0 0.0
          %1668 = vmatprep.subr.mxu0 0.0
          %1669 = vmatpush1.msra.mxu0 0.0
          %1670 = vmatprep.subr.mxu0 0.0
          %1671 = vmatpush1.msra.mxu0 0.0
          %1672 = vmatprep.subr.mxu0 0.0
          %1673 = vmatpush1.msra.mxu0 0.0
          %1674 = vmatprep.subr.mxu0 0.0
          %1675 = vmatpush1.msra.mxu0 0.0
          %1676 = vmatprep.subr.mxu0 0.0
          %1677 = vmatpush1.msra.mxu0 0.0
          %1678 = vmatprep.subr.mxu0 0.0
          %1679 = vmatpush1.msra.mxu0 0.0
          %1680 = vmatprep.subr.mxu0 0.0
          %1681 = vmatpush1.msra.mxu0 0.0
          %1682 = vmatprep.subr.mxu0 0.0
          %1683 = vmatpush1.msra.mxu0 0.0
          %1684 = vmatprep.subr.mxu0 0.0
          %1685 = vmatpush1.msra.mxu0 0.0
          %1686 = vmatprep.subr.mxu0 0.0
          %1687 = vmatpush1.msra.mxu0 0.0
          %1688 = vmatprep.subr.mxu0 0.0
          %1689 = vmatpush1.msra.mxu0 0.0
          %1690 = vmatprep.subr.mxu0 0.0
          %1691 = vmatpush1.msra.mxu0 0.0
          %1692 = vmatprep.subr.mxu0 0.0
          %1693 = vmatpush1.msra.mxu0 0.0
          %1694 = vmatprep.subr.mxu0 0.0
          %1695 = vmatpush1.msra.mxu0 0.0
          %1696 = vmatprep.subr.mxu0 0.0
          %1697 = vmatpush1.msra.mxu0 0.0
          %1698 = vmatprep.subr.mxu0 0.0
          %1699 = vmatpush1.msra.mxu0 0.0
          %1700 = vmatprep.subr.mxu0 0.0
          %1701 = vmatpush1.msra.mxu0 0.0
          %1702 = vmatprep.subr.mxu0 0.0
          %1703 = vmatpush1.msra.mxu0 0.0
          %1704 = vmatprep.subr.mxu0 0.0
          %1705 = vmatpush1.msra.mxu0 0.0
          %1706 = vmatprep.subr.mxu0 0.0
          %1707 = vmatpush1.msra.mxu0 0.0
          %1708 = vmatprep.subr.mxu0 0.0
          %1709 = vmatpush1.msra.mxu0 0.0
          %1710 = vmatprep.mubr.f32.mxu0 0.0
          %1711 = vmatmul.mubr.f32.gmra.mrb[0].mxu0 %v1644
          %v1712 = vpop.f32.mrb[0].mxu0
          %v1713 = vadd.f32 %v1642, %v1712
          %v1714 = vpop.f32.mrb[0].mxu0
          %1715 = vdwg.mxu0
          %1716 = vst [vmem:[%s698] sm:$0x1] %v1713
        $region96: #{encoder_forward.1} parent=87 // pred_fallthru
          _
        %s1717 = sand.u32 %s473, 1
        %s1718 = scalar_lea.sflag [#allocation4], %s1717
        %s1719 = sand.u32 %s473, 1
        %s1720 = scalar_lea.vmem [#allocation3], %s1719
        // Predicated region
        $region97: #{encoder_forward.1} parent=87 // pred_check
          %p1721 = pneg %p483
        $region98: #{encoder_forward.1} parent=87 // pred_check_branch
          %1723 = sbr.rel (%p1721) target = $region100
        $region99: #{encoder_forward.1} parent=87 // pred_region
          %s1725 = ssub.s32 16, 16
          %1726 = vsyncadd %s1718, %s1725
          %s1727 = smul.addr %s35, 16
          %s1728 = scalar_lea.hbm %s17, %s1727
          %s1730 = sshll.u32 %s1720, 4
          %s1731 = int_to_ptr.vmem [resolvable:$true] %s1730
          %1733 = dma.vmem_to_hbm [thread:$0]  %s1731, 16, %s1728, %s1718
        $region100: #{encoder_forward.1} parent=87 // pred_fallthru
          _
      $region88: #{encoder_forward.1} parent=5 // pred_fallthru
        _
      %p1734 = scmp.le.s32.totalorder 2, %s26
      // Predicated region
      $region101: #{encoder_forward.1} parent=5 // pred_check
        %p1735 = pneg %p1734
      $region102: #{encoder_forward.1} parent=5 // pred_check_branch
        %1737 = sbr.rel (%p1735) target = $region104
      $region103: #{encoder_forward.1} parent=5 // pred_region
        %s1738 = ssub.s32 %s26, 2
        // Predicated region
        $region105: #{encoder_forward.1} parent=103 // pred_check
          %p1739 = pneg %p489
        $region106: #{encoder_forward.1} parent=103 // pred_check_branch
          %1741 = sbr.rel (%p1739) target = $region108
        $region107: #{encoder_forward.1} parent=103 // pred_region
          %s1742 = sand.u32 %s474, 1
          %s1743 = scalar_lea.sflag [#allocation4], %s1742
          %s1744 = sand.u32 %s474, 1
          %s1745 = scalar_lea.vmem [#allocation3], %s1744
          %1746 = dma.done %s1743, 16
        $region108: #{encoder_forward.1} parent=103 // pred_fallthru
          _
      $region104: #{encoder_forward.1} parent=5 // pred_fallthru
        _
    $region6: #{encoder_forward.1} parent=1 // loop_footer
      %s30 = sadd.s32 1, %s26
    $region7: #{encoder_forward.1} parent=1 // loop_footer_branch
      %25 = sbr.rel target = $region3
    $region8: #{encoder_forward.1} parent=1 // loop_exit
      _
    %1747 = vsyncpa [#allocation4], 1
    %s1748 = scalar_lea.sflag [#allocation4], 1
    %1749 = vsyncpa %s1748, 1

</llo_original>
